<compile_context>
chip_gen: v5e
topology: v5e:2x2
jax: 0.10.0
libtpu: 0.0.40
codegen_flags: <defaults>
</compile_context>

<pallas_src>
import math
import functools

import numpy as np
import jax
import jax.numpy as jnp
from jax import lax
from jax.experimental import pallas as pl
from jax.experimental.pallas import tpu as pltpu


def _mha_kernel(q_ref, k_ref, v_ref,
                wq_ref, bq_ref, wk_ref, bk_ref, wv_ref, bv_ref,
                wm_ref, bm_ref,
                o_ref,
                qp_ref, kp_ref, vp_ref, msg_ref,
                *, num_heads, head_dim, eps):
    # Per-batch-element tile in NCL layout: (d_model, N).
    q = q_ref[0]
    k = k_ref[0]
    v = v_ref[0]

    scale = 1.0 / math.sqrt(head_dim)

    # 1x1 conv projections == channel matmuls (+ bias).  Weights were
    # pre-permuted on the host so head h occupies rows [h*hd, (h+1)*hd).
    # The 1/sqrt(head_dim) score scale is folded into Q here (cheaper than
    # scaling the (N,N) score matrix per head).  Projections are stored as
    # bf16 so the attention matmuls get native-rate MXU operands; softmax
    # and accumulation stay f32.
    qp_ref[...] = ((jnp.dot(wq_ref[...], q, preferred_element_type=jnp.float32)
                    + bq_ref[...]) * scale).astype(jnp.bfloat16)
    kp_ref[...] = (jnp.dot(wk_ref[...], k, preferred_element_type=jnp.float32)
                   + bk_ref[...]).astype(jnp.bfloat16)
    vp_ref[...] = (jnp.dot(wv_ref[...], v, preferred_element_type=jnp.float32)
                   + bv_ref[...]).astype(jnp.bfloat16)

    def head_body(h, carry):
        r0 = pl.multiple_of(h * head_dim, head_dim)
        qh = qp_ref[pl.ds(r0, head_dim), :]   # (head_dim, N) bf16
        kh = kp_ref[pl.ds(r0, head_dim), :]
        vh = vp_ref[pl.ds(r0, head_dim), :]
        # scores (N, N): contract head_dim (the sublane axis of both
        # operands) -> lane-dense in N, f32 accumulation on the MXU.
        s = lax.dot_general(qh, kh, (((0,), (0,)), ((), ())),
                            preferred_element_type=jnp.float32)
        # numerically-stable softmax over the key axis (lanes), in f32.
        s = s - jnp.max(s, axis=-1, keepdims=True)
        e = jnp.exp(s)
        p = e * pl.reciprocal(jnp.sum(e, axis=-1, keepdims=True), approx=True)
        # message (head_dim, N) = V_h @ P^T, written straight into the
        # (d_model, N) message scratch (no concatenate, head h -> its rows).
        msg_ref[pl.ds(r0, head_dim), :] = lax.dot_general(
            vh, p.astype(jnp.bfloat16), (((1,), (1,)), ((), ())),
            preferred_element_type=jnp.float32)
        return carry

    lax.fori_loop(0, num_heads, head_body, 0)

    # merge 1x1 conv (kept f32; negligible cost next to the attention matmuls).
    merged = (jnp.dot(wm_ref[...], msg_ref[...],
                      preferred_element_type=jnp.float32) + bm_ref[...])

    # InstanceNorm1d (affine=False): normalize each (batch, channel) over the
    # sequence axis (lanes), biased variance, eps = 1e-5.
    mean = jnp.mean(merged, axis=-1, keepdims=True)
    centered = merged - mean
    var = jnp.mean(centered * centered, axis=-1, keepdims=True)
    o_ref[0] = centered * lax.rsqrt(var + eps)


def prepare_params(params, num_heads):
    """One-time host-side (numpy) preprocessing of the Conv1d parameters.

    Permutes the Q/K/V projection *output* channels into head-contiguous
    order (kernel row r = h*head_dim + d  <->  PyTorch channel o = d*H + h),
    permutes the merge weight's *input* channels to match, and reshapes the
    biases to (d_model, 1) column vectors for lane-broadcast inside the kernel.
    """
    Wq, bq, Wk, bk, Wv, bv, Wm, bm = [np.asarray(p, dtype=np.float32)
                                      for p in params]
    d_model = Wq.shape[0]
    head_dim = d_model // num_heads
    perm = np.array([d * num_heads + h
                     for h in range(num_heads) for d in range(head_dim)],
                    dtype=np.int64)
    return (jnp.asarray(Wq[perm, :]), jnp.asarray(bq[perm].reshape(d_model, 1)),
            jnp.asarray(Wk[perm, :]), jnp.asarray(bk[perm].reshape(d_model, 1)),
            jnp.asarray(Wv[perm, :]), jnp.asarray(bv[perm].reshape(d_model, 1)),
            jnp.asarray(Wm[:, perm]), jnp.asarray(bm.reshape(d_model, 1)))


def multi_headed_attention(q, k, v, prepared_params, num_heads):
    """q, k, v: (B, d_model, N) float32 (PyTorch NCL layout) -> same layout."""
    B, d_model, N = q.shape
    assert d_model % num_heads == 0
    head_dim = d_model // num_heads

    kernel = functools.partial(_mha_kernel, num_heads=num_heads,
                               head_dim=head_dim, eps=1e-5)

    seq_spec = pl.BlockSpec((1, d_model, N), lambda b: (b, 0, 0))
    w_spec = pl.BlockSpec((d_model, d_model), lambda b: (0, 0))
    b_spec = pl.BlockSpec((d_model, 1), lambda b: (0, 0))

    return pl.pallas_call(
        kernel,
        out_shape=jax.ShapeDtypeStruct((B, d_model, N), jnp.float32),
        grid=(B,),
        in_specs=[seq_spec, seq_spec, seq_spec,
                  w_spec, b_spec, w_spec, b_spec, w_spec, b_spec,
                  w_spec, b_spec],
        out_specs=seq_spec,
        scratch_shapes=[pltpu.VMEM((d_model, N), jnp.bfloat16),   # Q proj
                        pltpu.VMEM((d_model, N), jnp.bfloat16),   # K proj
                        pltpu.VMEM((d_model, N), jnp.bfloat16),   # V proj
                        pltpu.VMEM((d_model, N), jnp.float32)],   # messages
        compiler_params=pltpu.CompilerParams(
            dimension_semantics=("parallel",)),
    )(q, k, v, *prepared_params)


def ref_forward(q, k, v, params, num_heads, eps=1e-5):
    """Pure-JAX reference mirroring the PyTorch module exactly (f32)."""
    Wq, bq, Wk, bk, Wv, bv, Wm, bm = params
    B, d_model, N = q.shape
    head_dim = d_model // num_heads

    def conv1x1(x, W, b):
        return jnp.einsum('oi,bin->bon', W, x) + b[None, :, None]

    qp = conv1x1(q, Wq, bq).reshape(B, head_dim, num_heads, N)
    kp = conv1x1(k, Wk, bk).reshape(B, head_dim, num_heads, N)
    vp = conv1x1(v, Wv, bv).reshape(B, head_dim, num_heads, N)
    scores = jnp.einsum('bdhn,bdhm->bhnm', qp, kp) / math.sqrt(head_dim)
    prob = jax.nn.softmax(scores, axis=-1)
    msg = jnp.einsum('bhnm,bdhm->bdhn', prob, vp).reshape(B, d_model, N)
    x = conv1x1(msg, Wm, bm)
    mean = jnp.mean(x, axis=-1, keepdims=True)
    var = jnp.var(x, axis=-1, keepdims=True)   # biased, like InstanceNorm1d
    return (x - mean) / jnp.sqrt(var + eps)


if __name__ == "__main__":
    # (8,128)-aligned small shapes: N=128 on lanes, head_dim=16 sublane rows.
    B, d_model, N, num_heads = 2, 64, 128, 4

    key = jax.random.PRNGKey(0)
    keys = jax.random.split(key, 11)

    q = jax.random.normal(keys[0], (B, d_model, N), jnp.float32)
    k = jax.random.normal(keys[1], (B, d_model, N), jnp.float32)
    v = jax.random.normal(keys[2], (B, d_model, N), jnp.float32)

    # Deterministic synthetic Conv1d(kernel_size=1) parameters:
    # weights (out_channels, in_channels), biases (out_channels,).
    wscale = 0.25
    Wq = jax.random.uniform(keys[3], (d_model, d_model), jnp.float32, -wscale, wscale)
    Wk = jax.random.uniform(keys[4], (d_model, d_model), jnp.float32, -wscale, wscale)
    Wv = jax.random.uniform(keys[5], (d_model, d_model), jnp.float32, -wscale, wscale)
    Wm = jax.random.uniform(keys[6], (d_model, d_model), jnp.float32, -wscale, wscale)
    bq = jax.random.uniform(keys[7], (d_model,), jnp.float32, -wscale, wscale)
    bk = jax.random.uniform(keys[8], (d_model,), jnp.float32, -wscale, wscale)
    bv = jax.random.uniform(keys[9], (d_model,), jnp.float32, -wscale, wscale)
    bm = jax.random.uniform(keys[10], (d_model,), jnp.float32, -wscale, wscale)

    params = (Wq, bq, Wk, bk, Wv, bv, Wm, bm)
    prepared = prepare_params(params, num_heads)     # one-time, host-side

    out = multi_headed_attention(q, k, v, prepared, num_heads)
    out = jax.block_until_ready(out)

    ref = ref_forward(q, k, v, params, num_heads)
    assert out.shape == (B, d_model, N), out.shape

    # bf16 MXU operands + approx-reciprocal softmax + InstanceNorm (which
    # rescales to unit variance, amplifying absolute error) => tolerances
    # loosened from the pure-f32 version, per the performance review.
    max_err = float(jnp.max(jnp.abs(out - ref)))
    rel_l2 = float(jnp.sqrt(jnp.sum((out - ref) ** 2) / jnp.sum(ref ** 2)))
    assert rel_l2 < 2e-2 and max_err < 1.5e-1, (rel_l2, max_err)

    print("KERNEL_OK")
</pallas_src>

<mosaic_0001>
module attributes {stable_mosaic.version = 11 : i64} {
  func.func @_mha_kernel(%arg0: i32, %arg1: memref<1x64x128xf32, #tpu.memory_space<vmem>>, %arg2: memref<1x64x128xf32, #tpu.memory_space<vmem>>, %arg3: memref<1x64x128xf32, #tpu.memory_space<vmem>>, %arg4: memref<64x64xf32, #tpu.memory_space<vmem>>, %arg5: memref<64x1xf32, #tpu.memory_space<vmem>>, %arg6: memref<64x64xf32, #tpu.memory_space<vmem>>, %arg7: memref<64x1xf32, #tpu.memory_space<vmem>>, %arg8: memref<64x64xf32, #tpu.memory_space<vmem>>, %arg9: memref<64x1xf32, #tpu.memory_space<vmem>>, %arg10: memref<64x64xf32, #tpu.memory_space<vmem>>, %arg11: memref<64x1xf32, #tpu.memory_space<vmem>>, %arg12: memref<1x64x128xf32, #tpu.memory_space<vmem>>, %arg13: memref<64x128xbf16, #tpu.memory_space<vmem>>, %arg14: memref<64x128xbf16, #tpu.memory_space<vmem>>, %arg15: memref<64x128xbf16, #tpu.memory_space<vmem>>, %arg16: memref<64x128xf32, #tpu.memory_space<vmem>>) attributes {dimension_semantics = [#tpu.dimension_semantics<parallel>], iteration_bounds = array<i64: 2>, scalar_prefetch = 0 : i64, scratch_operands = 4 : i64, tpu.core_type = #tpu.core_type<tc>, window_params = [{transform_indices = @transform_0, window_bounds = array<i64: 1, 64, 128>}, {transform_indices = @transform_1, window_bounds = array<i64: 1, 64, 128>}, {transform_indices = @transform_2, window_bounds = array<i64: 1, 64, 128>}, {pipeline_mode = #tpu.pipeline_mode<synchronous>, transform_indices = @transform_3, window_bounds = array<i64: 64, 64>}, {pipeline_mode = #tpu.pipeline_mode<synchronous>, transform_indices = @transform_4, window_bounds = array<i64: 64, 1>}, {pipeline_mode = #tpu.pipeline_mode<synchronous>, transform_indices = @transform_5, window_bounds = array<i64: 64, 64>}, {pipeline_mode = #tpu.pipeline_mode<synchronous>, transform_indices = @transform_6, window_bounds = array<i64: 64, 1>}, {pipeline_mode = #tpu.pipeline_mode<synchronous>, transform_indices = @transform_7, window_bounds = array<i64: 64, 64>}, {pipeline_mode = #tpu.pipeline_mode<synchronous>, transform_indices = @transform_8, window_bounds = array<i64: 64, 1>}, {pipeline_mode = #tpu.pipeline_mode<synchronous>, transform_indices = @transform_9, window_bounds = array<i64: 64, 64>}, {pipeline_mode = #tpu.pipeline_mode<synchronous>, transform_indices = @transform_10, window_bounds = array<i64: 64, 1>}, {transform_indices = @transform_11, window_bounds = array<i64: 1, 64, 128>}]} {
    %c0 = arith.constant 0 : index
    %c0_0 = arith.constant 0 : index
    %c0_1 = arith.constant 0 : index
    %0 = vector.load %arg1[%c0, %c0_0, %c0_1] : memref<1x64x128xf32, #tpu.memory_space<vmem>>, vector<1x64x128xf32>
    %1 = vector.shape_cast %0 : vector<1x64x128xf32> to vector<64x128xf32>
    %c0_2 = arith.constant 0 : index
    %c0_3 = arith.constant 0 : index
    %c0_4 = arith.constant 0 : index
    %2 = vector.load %arg2[%c0_2, %c0_3, %c0_4] : memref<1x64x128xf32, #tpu.memory_space<vmem>>, vector<1x64x128xf32>
    %3 = vector.shape_cast %2 : vector<1x64x128xf32> to vector<64x128xf32>
    %c0_5 = arith.constant 0 : index
    %c0_6 = arith.constant 0 : index
    %c0_7 = arith.constant 0 : index
    %4 = vector.load %arg3[%c0_5, %c0_6, %c0_7] : memref<1x64x128xf32, #tpu.memory_space<vmem>>, vector<1x64x128xf32>
    %5 = vector.shape_cast %4 : vector<1x64x128xf32> to vector<64x128xf32>
    %c0_8 = arith.constant 0 : index
    %c0_9 = arith.constant 0 : index
    %6 = vector.load %arg4[%c0_8, %c0_9] : memref<64x64xf32, #tpu.memory_space<vmem>>, vector<64x64xf32>
    %cst = arith.constant dense<0.000000e+00> : vector<64x128xf32>
    %7 = tpu.matmul %6, %1, %cst {dimension_numbers = #tpu.dot_dimension_numbers<[1], [0], [0], [1], [0, 0, 1, 1], [], []>} : vector<64x64xf32>, vector<64x128xf32>, vector<64x128xf32> -> vector<64x128xf32>
    %c0_10 = arith.constant 0 : index
    %c0_11 = arith.constant 0 : index
    %8 = vector.load %arg5[%c0_10, %c0_11] : memref<64x1xf32, #tpu.memory_space<vmem>>, vector<64x1xf32>
    %9 = vector.broadcast %8 : vector<64x1xf32> to vector<64x128xf32>
    %10 = arith.addf %7, %9 : vector<64x128xf32>
    %cst_12 = arith.constant 2.500000e-01 : f32
    %11 = vector.broadcast %cst_12 : f32 to vector<64x128xf32>
    %12 = arith.mulf %10, %11 : vector<64x128xf32>
    %13 = arith.truncf %12 : vector<64x128xf32> to vector<64x128xbf16>
    %c0_13 = arith.constant 0 : index
    %c0_14 = arith.constant 0 : index
    %14 = vector.load %arg13[%c0_13, %c0_14] : memref<64x128xbf16, #tpu.memory_space<vmem>>, vector<64x128xbf16>
    tpu.vector_store %arg13[%c0_13, %c0_14], %13 {strides = array<i32>} : memref<64x128xbf16, #tpu.memory_space<vmem>>, vector<64x128xbf16>,
    %c0_15 = arith.constant 0 : index
    %c0_16 = arith.constant 0 : index
    %15 = vector.load %arg6[%c0_15, %c0_16] : memref<64x64xf32, #tpu.memory_space<vmem>>, vector<64x64xf32>
    %cst_17 = arith.constant dense<0.000000e+00> : vector<64x128xf32>
    %16 = tpu.matmul %15, %3, %cst_17 {dimension_numbers = #tpu.dot_dimension_numbers<[1], [0], [0], [1], [0, 0, 1, 1], [], []>} : vector<64x64xf32>, vector<64x128xf32>, vector<64x128xf32> -> vector<64x128xf32>
    %c0_18 = arith.constant 0 : index
    %c0_19 = arith.constant 0 : index
    %17 = vector.load %arg7[%c0_18, %c0_19] : memref<64x1xf32, #tpu.memory_space<vmem>>, vector<64x1xf32>
    %18 = vector.broadcast %17 : vector<64x1xf32> to vector<64x128xf32>
    %19 = arith.addf %16, %18 : vector<64x128xf32>
    %20 = arith.truncf %19 : vector<64x128xf32> to vector<64x128xbf16>
    %c0_20 = arith.constant 0 : index
    %c0_21 = arith.constant 0 : index
    %21 = vector.load %arg14[%c0_20, %c0_21] : memref<64x128xbf16, #tpu.memory_space<vmem>>, vector<64x128xbf16>
    tpu.vector_store %arg14[%c0_20, %c0_21], %20 {strides = array<i32>} : memref<64x128xbf16, #tpu.memory_space<vmem>>, vector<64x128xbf16>,
    %c0_22 = arith.constant 0 : index
    %c0_23 = arith.constant 0 : index
    %22 = vector.load %arg8[%c0_22, %c0_23] : memref<64x64xf32, #tpu.memory_space<vmem>>, vector<64x64xf32>
    %cst_24 = arith.constant dense<0.000000e+00> : vector<64x128xf32>
    %23 = tpu.matmul %22, %5, %cst_24 {dimension_numbers = #tpu.dot_dimension_numbers<[1], [0], [0], [1], [0, 0, 1, 1], [], []>} : vector<64x64xf32>, vector<64x128xf32>, vector<64x128xf32> -> vector<64x128xf32>
    %c0_25 = arith.constant 0 : index
    %c0_26 = arith.constant 0 : index
    %24 = vector.load %arg9[%c0_25, %c0_26] : memref<64x1xf32, #tpu.memory_space<vmem>>, vector<64x1xf32>
    %25 = vector.broadcast %24 : vector<64x1xf32> to vector<64x128xf32>
    %26 = arith.addf %23, %25 : vector<64x128xf32>
    %27 = arith.truncf %26 : vector<64x128xf32> to vector<64x128xbf16>
    %c0_27 = arith.constant 0 : index
    %c0_28 = arith.constant 0 : index
    %28 = vector.load %arg15[%c0_27, %c0_28] : memref<64x128xbf16, #tpu.memory_space<vmem>>, vector<64x128xbf16>
    tpu.vector_store %arg15[%c0_27, %c0_28], %27 {strides = array<i32>} : memref<64x128xbf16, #tpu.memory_space<vmem>>, vector<64x128xbf16>,
    %c0_i32 = arith.constant 0 : i32
    %c4_i32 = arith.constant 4 : i32
    %29 = arith.addi %c0_i32, %c4_i32 : i32
    %c1_i32 = arith.constant 1 : i32
    scf.for %arg17 = %c0_i32 to %29 step %c1_i32  : i32 {
      %c16_i32 = arith.constant 16 : i32
      %55 = arith.muli %arg17, %c16_i32 : i32
      %56 = tpu.assume_multiple %55, 16 : i32
      %57 = arith.index_cast %56 : i32 to index
      %c0_45 = arith.constant 0 : index
      %58 = vector.load %arg13[%57, %c0_45] : memref<64x128xbf16, #tpu.memory_space<vmem>>, vector<16x128xbf16>
      %59 = arith.index_cast %56 : i32 to index
      %c0_46 = arith.constant 0 : index
      %60 = vector.load %arg14[%59, %c0_46] : memref<64x128xbf16, #tpu.memory_space<vmem>>, vector<16x128xbf16>
      %61 = arith.index_cast %56 : i32 to index
      %c0_47 = arith.constant 0 : index
      %62 = vector.load %arg15[%61, %c0_47] : memref<64x128xbf16, #tpu.memory_space<vmem>>, vector<16x128xbf16>
      %cst_48 = arith.constant dense<0.000000e+00> : vector<128x128xf32>
      %63 = tpu.matmul %58, %60, %cst_48 {dimension_numbers = #tpu.dot_dimension_numbers<[0], [0], [1], [1], [0, 1, 1, 1], [], []>} : vector<16x128xbf16>, vector<16x128xbf16>, vector<128x128xf32> -> vector<128x128xf32>
      %cst_49 = arith.constant dense<0xFF800000> : vector<128xf32>
      %64 = vector.multi_reduction <maximumf>, %63, %cst_49 [1] : vector<128x128xf32> to vector<128xf32>
      %65 = vector.shape_cast %64 : vector<128xf32> to vector<128x1xf32>
      %66 = vector.broadcast %65 : vector<128x1xf32> to vector<128x128xf32>
      %67 = arith.subf %63, %66 : vector<128x128xf32>
      %68 = math.exp %67 : vector<128x128xf32>
      %cst_50 = arith.constant dense<0.000000e+00> : vector<128xf32>
      %69 = vector.multi_reduction <add>, %68, %cst_50 [1] : vector<128x128xf32> to vector<128xf32>
      %70 = vector.shape_cast %69 : vector<128xf32> to vector<128x1xf32>
      %71 = tpu.reciprocal %70 {approx = true} : vector<128x1xf32> -> vector<128x1xf32>
      %72 = vector.broadcast %71 : vector<128x1xf32> to vector<128x128xf32>
      %73 = arith.mulf %68, %72 : vector<128x128xf32>
      %74 = arith.truncf %73 : vector<128x128xf32> to vector<128x128xbf16>
      %cst_51 = arith.constant dense<0.000000e+00> : vector<16x128xf32>
      %75 = tpu.matmul %62, %74, %cst_51 {dimension_numbers = #tpu.dot_dimension_numbers<[1], [1], [0], [0], [0, 0, 1, 0], [], []>} : vector<16x128xbf16>, vector<128x128xbf16>, vector<16x128xf32> -> vector<16x128xf32>
      %76 = arith.index_cast %56 : i32 to index
      %c0_52 = arith.constant 0 : index
      %77 = vector.load %arg16[%76, %c0_52] : memref<64x128xf32, #tpu.memory_space<vmem>>, vector<16x128xf32>
      tpu.vector_store %arg16[%76, %c0_52], %75 {strides = array<i32>} : memref<64x128xf32, #tpu.memory_space<vmem>>, vector<16x128xf32>,
    }
    %c4_i32_29 = arith.constant 4 : i32
    %c0_30 = arith.constant 0 : index
    %c0_31 = arith.constant 0 : index
    %30 = vector.load %arg10[%c0_30, %c0_31] : memref<64x64xf32, #tpu.memory_space<vmem>>, vector<64x64xf32>
    %c0_32 = arith.constant 0 : index
    %c0_33 = arith.constant 0 : index
    %31 = vector.load %arg16[%c0_32, %c0_33] : memref<64x128xf32, #tpu.memory_space<vmem>>, vector<64x128xf32>
    %cst_34 = arith.constant dense<0.000000e+00> : vector<64x128xf32>
    %32 = tpu.matmul %30, %31, %cst_34 {dimension_numbers = #tpu.dot_dimension_numbers<[1], [0], [0], [1], [0, 0, 1, 1], [], []>} : vector<64x64xf32>, vector<64x128xf32>, vector<64x128xf32> -> vector<64x128xf32>
    %c0_35 = arith.constant 0 : index
    %c0_36 = arith.constant 0 : index
    %33 = vector.load %arg11[%c0_35, %c0_36] : memref<64x1xf32, #tpu.memory_space<vmem>>, vector<64x1xf32>
    %34 = vector.broadcast %33 : vector<64x1xf32> to vector<64x128xf32>
    %35 = arith.addf %32, %34 : vector<64x128xf32>
    %cst_37 = arith.constant dense<0.000000e+00> : vector<64xf32>
    %36 = vector.multi_reduction <add>, %35, %cst_37 [1] : vector<64x128xf32> to vector<64xf32>
    %37 = vector.shape_cast %36 : vector<64xf32> to vector<64x1xf32>
    %cst_38 = arith.constant 1.280000e+02 : f32
    %38 = vector.broadcast %cst_38 : f32 to vector<64x1xf32>
    %39 = arith.divf %37, %38 : vector<64x1xf32>
    %40 = vector.broadcast %39 : vector<64x1xf32> to vector<64x128xf32>
    %41 = arith.subf %35, %40 : vector<64x128xf32>
    %42 = arith.mulf %41, %41 : vector<64x128xf32>
    %cst_39 = arith.constant dense<0.000000e+00> : vector<64xf32>
    %43 = vector.multi_reduction <add>, %42, %cst_39 [1] : vector<64x128xf32> to vector<64xf32>
    %44 = vector.shape_cast %43 : vector<64xf32> to vector<64x1xf32>
    %cst_40 = arith.constant 1.280000e+02 : f32
    %45 = vector.broadcast %cst_40 : f32 to vector<64x1xf32>
    %46 = arith.divf %44, %45 : vector<64x1xf32>
    %cst_41 = arith.constant 9.99999974E-6 : f32
    %47 = vector.broadcast %cst_41 : f32 to vector<64x1xf32>
    %48 = arith.addf %46, %47 : vector<64x1xf32>
    %49 = math.rsqrt %48 : vector<64x1xf32>
    %50 = vector.broadcast %49 : vector<64x1xf32> to vector<64x128xf32>
    %51 = arith.mulf %41, %50 : vector<64x128xf32>
    %c0_42 = arith.constant 0 : index
    %c0_43 = arith.constant 0 : index
    %c0_44 = arith.constant 0 : index
    %52 = vector.load %arg12[%c0_42, %c0_43, %c0_44] : memref<1x64x128xf32, #tpu.memory_space<vmem>>, vector<1x64x128xf32>
    %53 = vector.shape_cast %52 : vector<1x64x128xf32> to vector<64x128xf32>
    %54 = vector.shape_cast %51 : vector<64x128xf32> to vector<1x64x128xf32>
    tpu.vector_store %arg12[%c0_42, %c0_43, %c0_44], %54 {strides = array<i32>} : memref<1x64x128xf32, #tpu.memory_space<vmem>>, vector<1x64x128xf32>,
    return
  }
  func.func @transform_0(%arg0: i32) -> (i32, i32, i32) {
    %c0_i32 = arith.constant 0 : i32
    %c0_i32_0 = arith.constant 0 : i32
    %c0_i32_1 = arith.constant 0 : i32
    return %arg0, %c0_i32, %c0_i32_0 : i32, i32, i32
  }
  func.func @transform_1(%arg0: i32) -> (i32, i32, i32) {
    %c0_i32 = arith.constant 0 : i32
    %c0_i32_0 = arith.constant 0 : i32
    %c0_i32_1 = arith.constant 0 : i32
    return %arg0, %c0_i32, %c0_i32_0 : i32, i32, i32
  }
  func.func @transform_2(%arg0: i32) -> (i32, i32, i32) {
    %c0_i32 = arith.constant 0 : i32
    %c0_i32_0 = arith.constant 0 : i32
    %c0_i32_1 = arith.constant 0 : i32
    return %arg0, %c0_i32, %c0_i32_0 : i32, i32, i32
  }
  func.func @transform_3(%arg0: i32) -> (i32, i32) {
    %c0_i32 = arith.constant 0 : i32
    %c0_i32_0 = arith.constant 0 : i32
    %c0_i32_1 = arith.constant 0 : i32
    return %c0_i32, %c0_i32_0 : i32, i32
  }
  func.func @transform_4(%arg0: i32) -> (i32, i32) {
    %c0_i32 = arith.constant 0 : i32
    %c0_i32_0 = arith.constant 0 : i32
    %c0_i32_1 = arith.constant 0 : i32
    return %c0_i32, %c0_i32_0 : i32, i32
  }
  func.func @transform_5(%arg0: i32) -> (i32, i32) {
    %c0_i32 = arith.constant 0 : i32
    %c0_i32_0 = arith.constant 0 : i32
    %c0_i32_1 = arith.constant 0 : i32
    return %c0_i32, %c0_i32_0 : i32, i32
  }
  func.func @transform_6(%arg0: i32) -> (i32, i32) {
    %c0_i32 = arith.constant 0 : i32
    %c0_i32_0 = arith.constant 0 : i32
    %c0_i32_1 = arith.constant 0 : i32
    return %c0_i32, %c0_i32_0 : i32, i32
  }
  func.func @transform_7(%arg0: i32) -> (i32, i32) {
    %c0_i32 = arith.constant 0 : i32
    %c0_i32_0 = arith.constant 0 : i32
    %c0_i32_1 = arith.constant 0 : i32
    return %c0_i32, %c0_i32_0 : i32, i32
  }
  func.func @transform_8(%arg0: i32) -> (i32, i32) {
    %c0_i32 = arith.constant 0 : i32
    %c0_i32_0 = arith.constant 0 : i32
    %c0_i32_1 = arith.constant 0 : i32
    return %c0_i32, %c0_i32_0 : i32, i32
  }
  func.func @transform_9(%arg0: i32) -> (i32, i32) {
    %c0_i32 = arith.constant 0 : i32
    %c0_i32_0 = arith.constant 0 : i32
    %c0_i32_1 = arith.constant 0 : i32
    return %c0_i32, %c0_i32_0 : i32, i32
  }
  func.func @transform_10(%arg0: i32) -> (i32, i32) {
    %c0_i32 = arith.constant 0 : i32
    %c0_i32_0 = arith.constant 0 : i32
    %c0_i32_1 = arith.constant 0 : i32
    return %c0_i32, %c0_i32_0 : i32, i32
  }
  func.func @transform_11(%arg0: i32) -> (i32, i32, i32) {
    %c0_i32 = arith.constant 0 : i32
    %c0_i32_0 = arith.constant 0 : i32
    %c0_i32_1 = arith.constant 0 : i32
    return %arg0, %c0_i32, %c0_i32_0 : i32, i32, i32
  }
}

</mosaic_0001>

<llo_original>
// kernel: tpu_custom_call.1
$region0: #{tpu_custom_call.1}
  #allocation0 [shape = 'u32[]', space=smem, size = 0x4, offset = 0x4, fixed_abs, tag = 'smem constant byte address 0x4 - core index']
  #allocation1 [shape = 'u32[72,128]{1,0:T(1,128)}', space=vmem, size = 0x9000, scoped, tag = 'internal scratch']
  #allocation2 [shape = 'bf16[64,128]{1,0:T(8,128)(2,1)}', space=vmem, size = 0x4000, scoped, tag = 'scratch operand']
  #allocation3 [shape = 'bf16[64,128]{1,0:T(8,128)(2,1)}', space=vmem, size = 0x4000, scoped, tag = 'scratch operand']
  #allocation4 [shape = 'bf16[64,128]{1,0:T(8,128)(2,1)}', space=vmem, size = 0x4000, scoped, tag = 'scratch operand']
  #allocation5 [shape = 'f32[64,128]{1,0:T(8,128)}', space=vmem, size = 0x8000, scoped, tag = 'scratch operand']
  %s0 = inlined_call_operand.vmem [shape: f32[2,64,128], index: 0, kind: input, shape index: {}]
  %s1 = inlined_call_operand.vmem [shape: f32[2,64,128], index: 1, kind: input, shape index: {}]
  %s2 = inlined_call_operand.hbm [shape: f32[2,64,128], index: 2, kind: input, shape index: {}]
  %s3 = inlined_call_operand.hbm [shape: f32[64,64], index: 3, kind: input, shape index: {}]
  %s4 = inlined_call_operand.vmem [shape: f32[64,1], index: 4, kind: input, shape index: {}]
  %s5 = inlined_call_operand.hbm [shape: f32[64,64], index: 5, kind: input, shape index: {}]
  %s6 = inlined_call_operand.vmem [shape: f32[64,1], index: 6, kind: input, shape index: {}]
  %s7 = inlined_call_operand.hbm [shape: f32[64,64], index: 7, kind: input, shape index: {}]
  %s8 = inlined_call_operand.vmem [shape: f32[64,1], index: 8, kind: input, shape index: {}]
  %s9 = inlined_call_operand.hbm [shape: f32[64,64], index: 9, kind: input, shape index: {}]
  %s10 = inlined_call_operand.vmem [shape: f32[64,1], index: 10, kind: input, shape index: {}]
  %s11 = inlined_call_operand.hbm [shape: f32[2,64,128], index: 11, kind: output, shape index: {}]
  %s12 = sld [smem:[#allocation0]]
  $region104: #{tpu_custom_call.1} parent=0
    _
  %s14 = ssub.s32 1, %s12
  %s15 = scalar_select 0, %s14, %s12
  $region1: #{tpu_custom_call.1} parent=0
    #allocation6 [shape = 'u8[65536]{0}', space=vmem, size = 0x10000, scoped, tag = 'input window, operand 2']
    #allocation7 [shape = 's32[2]{0}', space=sflag, size = 0x8, scoped, tag = 'scoped memory for tpu_custom_call.1']
    #allocation8 [shape = 's32[2]{0}', space=sflag, size = 0x8, scoped, tag = 'scoped memory for tpu_custom_call.1']
    #allocation9 [shape = 'u8[32768]{0}', space=vmem, size = 0x8000, scoped, tag = 'input window, operand 3, single buffered']
    #allocation10 [shape = 's32[1]{0}', space=sflag, size = 0x4, scoped, tag = 'scoped memory for tpu_custom_call.1']
    #allocation11 [shape = 'u8[32768]{0}', space=vmem, size = 0x8000, scoped, tag = 'input window, operand 5, single buffered']
    #allocation12 [shape = 'u8[32768]{0}', space=vmem, size = 0x8000, scoped, tag = 'input window, operand 7, single buffered']
    #allocation13 [shape = 's32[1]{0}', space=sflag, size = 0x4, scoped, tag = 'scoped memory for tpu_custom_call.1']
    #allocation14 [shape = 'u8[32768]{0}', space=vmem, size = 0x8000, scoped, tag = 'input window, operand 9, single buffered']
    #allocation15 [shape = 'u8[65536]{0}', space=vmem, size = 0x10000, scoped, tag = 'output window, operand 0']
    %16 = vsyncpa [#allocation7], 0
    %s17 = scalar_lea.sflag [#allocation7], 1
    %18 = vsyncpa %s17, 0
    %19 = vsyncpa [#allocation10], 0
    %20 = vsyncpa [#allocation13], 0
    %21 = vsyncpa [#allocation8], 0
    %s22 = scalar_lea.sflag [#allocation8], 1
    %23 = vsyncpa %s22, 0
    loop: start=0, step=1, limit=4
    $region2: #{tpu_custom_call.1} parent=1 // loop_pre_header
      _
    $region3: #{tpu_custom_call.1} parent=1 // loop_header
      %s25 = sphi 0, %s29
      %p26 = scmp.ge.s32.totalorder %s25, 4
      %s35 = sphi 0, %s37
      %s38 = sphi 0, %s35
      %s39 = sphi 0, %s38
      %s55 = sphi 0, %s39
      %s61 = sphi 0, %s63
      %s64 = sphi 0, %s61
      %s65 = sphi 0, %s64
      %s81 = sphi 0, %s65
      %s87 = sphi 0, %s89
      %s90 = sphi 0, %s87
      %s91 = sphi 0, %s90
      %s107 = sphi 0, %s91
      %s111 = sphi 0, %s111
      %s113 = sphi 0, %s111
      %s114 = sphi 0, %s113
      %s128 = sphi 0, %s114
      %s132 = sphi 0, %s132
      %s134 = sphi 0, %s132
      %s135 = sphi 0, %s134
      %s149 = sphi 0, %s135
      %s153 = sphi 0, %s153
      %s155 = sphi 0, %s153
      %s156 = sphi 0, %s155
      %s170 = sphi 0, %s156
      %s174 = sphi 0, %s174
      %s176 = sphi 0, %s174
      %s177 = sphi 0, %s176
      %s191 = sphi 0, %s177
      %s195 = sphi 0, %s195
      %s197 = sphi 0, %s195
      %s198 = sphi 0, %s197
      %s212 = sphi 0, %s198
      %s216 = sphi 0, %s216
      %s218 = sphi 0, %s216
      %s219 = sphi 0, %s218
      %s233 = sphi 0, %s219
      %s237 = sphi 0, %s237
      %s239 = sphi 0, %s237
      %s240 = sphi 0, %s239
      %s254 = sphi 0, %s240
      %s258 = sphi 0, %s258
      %s260 = sphi 0, %s258
      %s261 = sphi 0, %s260
      %s275 = sphi 0, %s261
      %s281 = sphi 0, %s283
      %s284 = sphi 0, %s281
      %s285 = sphi 0, %s284
      %s301 = sphi 0, %s285
    $region4: #{tpu_custom_call.1} parent=1 // loop_header_branch
      %28 = sbr.rel (%p26) target = $region8
    $region5: #{tpu_custom_call.1} parent=1 // loop_body
      %s30 = ssub.s32 %s25, 1
      %s31 = ssub.s32 %s25, 2
      %s32 = sadd.s32 %s25, 1
      %s33 = ssub.s32 %s25, %s32
      %p34 = scmp.eq.s32.totalorder %s33, 0
      %s36 = sadd.s32 %s35, 1
      %s37 = scalar_select %p34, %s35, %s36
      %p40 = pneg %p34
      %p41 = scmp.eq.s32.totalorder %s25, 1
      %p42 = por %p40, %p41
      %p43 = scmp.ne.s32.totalorder %s35, %s38
      %p44 = scmp.eq.s32.totalorder %s25, 0
      %p45 = por %p43, %p44
      %p46 = scmp.ne.s32.totalorder %s35, %s38
      %p47 = scmp.eq.s32.totalorder %s30, 1
      %p48 = por %p46, %p47
      %p49 = scmp.ne.s32.totalorder %s38, %s39
      %p50 = scmp.eq.s32.totalorder %s30, 0
      %p51 = por %p49, %p50
      %p52 = scmp.ne.s32.totalorder %s38, %s39
      %p53 = scmp.eq.s32.totalorder %s31, 1
      %p54 = por %p52, %p53
      %p56 = scmp.ne.s32.totalorder %s39, %s55
      %p57 = scmp.eq.s32.totalorder %s31, 0
      %p58 = por %p56, %p57
      %s59 = ssub.s32 %s25, %s32
      %p60 = scmp.eq.s32.totalorder %s59, 0
      %s62 = sadd.s32 %s61, 1
      %s63 = scalar_select %p60, %s61, %s62
      %p66 = pneg %p60
      %p67 = scmp.eq.s32.totalorder %s25, 1
      %p68 = por %p66, %p67
      %p69 = scmp.ne.s32.totalorder %s61, %s64
      %p70 = scmp.eq.s32.totalorder %s25, 0
      %p71 = por %p69, %p70
      %p72 = scmp.ne.s32.totalorder %s61, %s64
      %p73 = scmp.eq.s32.totalorder %s30, 1
      %p74 = por %p72, %p73
      %p75 = scmp.ne.s32.totalorder %s64, %s65
      %p76 = scmp.eq.s32.totalorder %s30, 0
      %p77 = por %p75, %p76
      %p78 = scmp.ne.s32.totalorder %s64, %s65
      %p79 = scmp.eq.s32.totalorder %s31, 1
      %p80 = por %p78, %p79
      %p82 = scmp.ne.s32.totalorder %s65, %s81
      %p83 = scmp.eq.s32.totalorder %s31, 0
      %p84 = por %p82, %p83
      %s85 = ssub.s32 %s25, %s32
      %p86 = scmp.eq.s32.totalorder %s85, 0
      %s88 = sadd.s32 %s87, 1
      %s89 = scalar_select %p86, %s87, %s88
      %p92 = pneg %p86
      %p93 = scmp.eq.s32.totalorder %s25, 1
      %p94 = por %p92, %p93
      %p95 = scmp.ne.s32.totalorder %s87, %s90
      %p96 = scmp.eq.s32.totalorder %s25, 0
      %p97 = por %p95, %p96
      %p98 = scmp.ne.s32.totalorder %s87, %s90
      %p99 = scmp.eq.s32.totalorder %s30, 1
      %p100 = por %p98, %p99
      %p101 = scmp.ne.s32.totalorder %s90, %s91
      %p102 = scmp.eq.s32.totalorder %s30, 0
      %p103 = por %p101, %p102
      %p104 = scmp.ne.s32.totalorder %s90, %s91
      %p105 = scmp.eq.s32.totalorder %s31, 1
      %p106 = por %p104, %p105
      %p108 = scmp.ne.s32.totalorder %s91, %s107
      %p109 = scmp.eq.s32.totalorder %s31, 0
      %p110 = por %p108, %p109
      %s112 = sadd.s32 %s111, 1
      %p115 = scmp.eq.s32.totalorder %s25, 1
      %p116 = scmp.ne.s32.totalorder %s111, %s113
      %p117 = scmp.eq.s32.totalorder %s25, 0
      %p118 = por %p116, %p117
      %p119 = scmp.ne.s32.totalorder %s111, %s113
      %p120 = scmp.eq.s32.totalorder %s30, 1
      %p121 = por %p119, %p120
      %p122 = scmp.ne.s32.totalorder %s113, %s114
      %p123 = scmp.eq.s32.totalorder %s30, 0
      %p124 = por %p122, %p123
      %p125 = scmp.ne.s32.totalorder %s113, %s114
      %p126 = scmp.eq.s32.totalorder %s31, 1
      %p127 = por %p125, %p126
      %p129 = scmp.ne.s32.totalorder %s114, %s128
      %p130 = scmp.eq.s32.totalorder %s31, 0
      %p131 = por %p129, %p130
      %s133 = sadd.s32 %s132, 1
      %p136 = scmp.eq.s32.totalorder %s25, 1
      %p137 = scmp.ne.s32.totalorder %s132, %s134
      %p138 = scmp.eq.s32.totalorder %s25, 0
      %p139 = por %p137, %p138
      %p140 = scmp.ne.s32.totalorder %s132, %s134
      %p141 = scmp.eq.s32.totalorder %s30, 1
      %p142 = por %p140, %p141
      %p143 = scmp.ne.s32.totalorder %s134, %s135
      %p144 = scmp.eq.s32.totalorder %s30, 0
      %p145 = por %p143, %p144
      %p146 = scmp.ne.s32.totalorder %s134, %s135
      %p147 = scmp.eq.s32.totalorder %s31, 1
      %p148 = por %p146, %p147
      %p150 = scmp.ne.s32.totalorder %s135, %s149
      %p151 = scmp.eq.s32.totalorder %s31, 0
      %p152 = por %p150, %p151
      %s154 = sadd.s32 %s153, 1
      %p157 = scmp.eq.s32.totalorder %s25, 1
      %p158 = scmp.ne.s32.totalorder %s153, %s155
      %p159 = scmp.eq.s32.totalorder %s25, 0
      %p160 = por %p158, %p159
      %p161 = scmp.ne.s32.totalorder %s153, %s155
      %p162 = scmp.eq.s32.totalorder %s30, 1
      %p163 = por %p161, %p162
      %p164 = scmp.ne.s32.totalorder %s155, %s156
      %p165 = scmp.eq.s32.totalorder %s30, 0
      %p166 = por %p164, %p165
      %p167 = scmp.ne.s32.totalorder %s155, %s156
      %p168 = scmp.eq.s32.totalorder %s31, 1
      %p169 = por %p167, %p168
      %p171 = scmp.ne.s32.totalorder %s156, %s170
      %p172 = scmp.eq.s32.totalorder %s31, 0
      %p173 = por %p171, %p172
      %s175 = sadd.s32 %s174, 1
      %p178 = scmp.eq.s32.totalorder %s25, 1
      %p179 = scmp.ne.s32.totalorder %s174, %s176
      %p180 = scmp.eq.s32.totalorder %s25, 0
      %p181 = por %p179, %p180
      %p182 = scmp.ne.s32.totalorder %s174, %s176
      %p183 = scmp.eq.s32.totalorder %s30, 1
      %p184 = por %p182, %p183
      %p185 = scmp.ne.s32.totalorder %s176, %s177
      %p186 = scmp.eq.s32.totalorder %s30, 0
      %p187 = por %p185, %p186
      %p188 = scmp.ne.s32.totalorder %s176, %s177
      %p189 = scmp.eq.s32.totalorder %s31, 1
      %p190 = por %p188, %p189
      %p192 = scmp.ne.s32.totalorder %s177, %s191
      %p193 = scmp.eq.s32.totalorder %s31, 0
      %p194 = por %p192, %p193
      %s196 = sadd.s32 %s195, 1
      %p199 = scmp.eq.s32.totalorder %s25, 1
      %p200 = scmp.ne.s32.totalorder %s195, %s197
      %p201 = scmp.eq.s32.totalorder %s25, 0
      %p202 = por %p200, %p201
      %p203 = scmp.ne.s32.totalorder %s195, %s197
      %p204 = scmp.eq.s32.totalorder %s30, 1
      %p205 = por %p203, %p204
      %p206 = scmp.ne.s32.totalorder %s197, %s198
      %p207 = scmp.eq.s32.totalorder %s30, 0
      %p208 = por %p206, %p207
      %p209 = scmp.ne.s32.totalorder %s197, %s198
      %p210 = scmp.eq.s32.totalorder %s31, 1
      %p211 = por %p209, %p210
      %p213 = scmp.ne.s32.totalorder %s198, %s212
      %p214 = scmp.eq.s32.totalorder %s31, 0
      %p215 = por %p213, %p214
      %s217 = sadd.s32 %s216, 1
      %p220 = scmp.eq.s32.totalorder %s25, 1
      %p221 = scmp.ne.s32.totalorder %s216, %s218
      %p222 = scmp.eq.s32.totalorder %s25, 0
      %p223 = por %p221, %p222
      %p224 = scmp.ne.s32.totalorder %s216, %s218
      %p225 = scmp.eq.s32.totalorder %s30, 1
      %p226 = por %p224, %p225
      %p227 = scmp.ne.s32.totalorder %s218, %s219
      %p228 = scmp.eq.s32.totalorder %s30, 0
      %p229 = por %p227, %p228
      %p230 = scmp.ne.s32.totalorder %s218, %s219
      %p231 = scmp.eq.s32.totalorder %s31, 1
      %p232 = por %p230, %p231
      %p234 = scmp.ne.s32.totalorder %s219, %s233
      %p235 = scmp.eq.s32.totalorder %s31, 0
      %p236 = por %p234, %p235
      %s238 = sadd.s32 %s237, 1
      %p241 = scmp.eq.s32.totalorder %s25, 1
      %p242 = scmp.ne.s32.totalorder %s237, %s239
      %p243 = scmp.eq.s32.totalorder %s25, 0
      %p244 = por %p242, %p243
      %p245 = scmp.ne.s32.totalorder %s237, %s239
      %p246 = scmp.eq.s32.totalorder %s30, 1
      %p247 = por %p245, %p246
      %p248 = scmp.ne.s32.totalorder %s239, %s240
      %p249 = scmp.eq.s32.totalorder %s30, 0
      %p250 = por %p248, %p249
      %p251 = scmp.ne.s32.totalorder %s239, %s240
      %p252 = scmp.eq.s32.totalorder %s31, 1
      %p253 = por %p251, %p252
      %p255 = scmp.ne.s32.totalorder %s240, %s254
      %p256 = scmp.eq.s32.totalorder %s31, 0
      %p257 = por %p255, %p256
      %s259 = sadd.s32 %s258, 1
      %p262 = scmp.eq.s32.totalorder %s25, 1
      %p263 = scmp.ne.s32.totalorder %s258, %s260
      %p264 = scmp.eq.s32.totalorder %s25, 0
      %p265 = por %p263, %p264
      %p266 = scmp.ne.s32.totalorder %s258, %s260
      %p267 = scmp.eq.s32.totalorder %s30, 1
      %p268 = por %p266, %p267
      %p269 = scmp.ne.s32.totalorder %s260, %s261
      %p270 = scmp.eq.s32.totalorder %s30, 0
      %p271 = por %p269, %p270
      %p272 = scmp.ne.s32.totalorder %s260, %s261
      %p273 = scmp.eq.s32.totalorder %s31, 1
      %p274 = por %p272, %p273
      %p276 = scmp.ne.s32.totalorder %s261, %s275
      %p277 = scmp.eq.s32.totalorder %s31, 0
      %p278 = por %p276, %p277
      %s279 = ssub.s32 %s25, %s32
      %p280 = scmp.eq.s32.totalorder %s279, 0
      %s282 = sadd.s32 %s281, 1
      %s283 = scalar_select %p280, %s281, %s282
      %p286 = pneg %p280
      %p287 = scmp.eq.s32.totalorder %s25, 1
      %p288 = por %p286, %p287
      %p289 = scmp.ne.s32.totalorder %s281, %s284
      %p290 = scmp.eq.s32.totalorder %s25, 0
      %p291 = por %p289, %p290
      %p292 = scmp.ne.s32.totalorder %s281, %s284
      %p293 = scmp.eq.s32.totalorder %s30, 1
      %p294 = por %p292, %p293
      %p295 = scmp.ne.s32.totalorder %s284, %s285
      %p296 = scmp.eq.s32.totalorder %s30, 0
      %p297 = por %p295, %p296
      %p298 = scmp.ne.s32.totalorder %s284, %s285
      %p299 = scmp.eq.s32.totalorder %s31, 1
      %p300 = por %p298, %p299
      %p302 = scmp.ne.s32.totalorder %s285, %s301
      %p303 = scmp.eq.s32.totalorder %s31, 0
      %p304 = por %p302, %p303
      %p305 = scmp.le.s32.totalorder 1, %s25
      %p306 = scmp.lt.s32.totalorder %s25, 3
      %p307 = pnand %p305, %p306
      %p308 = pneg %p307
      // Predicated region
      $region9: #{tpu_custom_call.1} parent=5 // pred_check
        _
      $region10: #{tpu_custom_call.1} parent=5 // pred_check_branch
        %310 = sbr.rel (%p307) target = $region12
      $region11: #{tpu_custom_call.1} parent=5 // pred_region
        %s311 = ssub.s32 %s25, 1
        // Predicated region
        $region13: #{tpu_custom_call.1} parent=11 // pred_check
          %p312 = pneg %p124
        $region14: #{tpu_custom_call.1} parent=11 // pred_check_branch
          %314 = sbr.rel (%p312) target = $region16
        $region15: #{tpu_custom_call.1} parent=11 // pred_region
          %316 = vsyncadd [#allocation10], 0
          %s317 = sshll.u32 %s3, 4
          %s318 = int_to_ptr.hbm [resolvable:$true] %s317
          %s319 = sshll.u32 [#allocation9], 4
          %s320 = int_to_ptr.vmem [resolvable:$true] %s319
          %325 = dma.hbm_to_vmem [thread:$0]  %s318, 1024, %s320, [#allocation10], 128, 128, 8
        $region16: #{tpu_custom_call.1} parent=11 // pred_fallthru
          _
        // Predicated region
        $region17: #{tpu_custom_call.1} parent=11 // pred_check
          %p326 = pneg %p145
        $region18: #{tpu_custom_call.1} parent=11 // pred_check_branch
          %328 = sbr.rel (%p326) target = $region20
        $region19: #{tpu_custom_call.1} parent=11 // pred_region
          _
        $region20: #{tpu_custom_call.1} parent=11 // pred_fallthru
          _
        // Predicated region
        $region21: #{tpu_custom_call.1} parent=11 // pred_check
          %p329 = pneg %p166
        $region22: #{tpu_custom_call.1} parent=11 // pred_check_branch
          %331 = sbr.rel (%p329) target = $region24
        $region23: #{tpu_custom_call.1} parent=11 // pred_region
          %333 = vsyncadd [#allocation10], 0
          %s334 = sshll.u32 %s5, 4
          %s335 = int_to_ptr.hbm [resolvable:$true] %s334
          %s336 = sshll.u32 [#allocation11], 4
          %s337 = int_to_ptr.vmem [resolvable:$true] %s336
          %342 = dma.hbm_to_vmem [thread:$0]  %s335, 1024, %s337, [#allocation10], 128, 128, 8
        $region24: #{tpu_custom_call.1} parent=11 // pred_fallthru
          _
        // Predicated region
        $region25: #{tpu_custom_call.1} parent=11 // pred_check
          %p343 = pneg %p187
        $region26: #{tpu_custom_call.1} parent=11 // pred_check_branch
          %345 = sbr.rel (%p343) target = $region28
        $region27: #{tpu_custom_call.1} parent=11 // pred_region
          _
        $region28: #{tpu_custom_call.1} parent=11 // pred_fallthru
          _
        // Predicated region
        $region29: #{tpu_custom_call.1} parent=11 // pred_check
          %p346 = pneg %p208
        $region30: #{tpu_custom_call.1} parent=11 // pred_check_branch
          %348 = sbr.rel (%p346) target = $region32
        $region31: #{tpu_custom_call.1} parent=11 // pred_region
          %350 = vsyncadd [#allocation13], 0
          %s351 = sshll.u32 %s7, 4
          %s352 = int_to_ptr.hbm [resolvable:$true] %s351
          %s353 = sshll.u32 [#allocation12], 4
          %s354 = int_to_ptr.vmem [resolvable:$true] %s353
          %359 = dma.hbm_to_vmem [thread:$0]  %s352, 1024, %s354, [#allocation13], 128, 128, 8
        $region32: #{tpu_custom_call.1} parent=11 // pred_fallthru
          _
        // Predicated region
        $region33: #{tpu_custom_call.1} parent=11 // pred_check
          %p360 = pneg %p229
        $region34: #{tpu_custom_call.1} parent=11 // pred_check_branch
          %362 = sbr.rel (%p360) target = $region36
        $region35: #{tpu_custom_call.1} parent=11 // pred_region
          _
        $region36: #{tpu_custom_call.1} parent=11 // pred_fallthru
          _
        // Predicated region
        $region37: #{tpu_custom_call.1} parent=11 // pred_check
          %p363 = pneg %p250
        $region38: #{tpu_custom_call.1} parent=11 // pred_check_branch
          %365 = sbr.rel (%p363) target = $region40
        $region39: #{tpu_custom_call.1} parent=11 // pred_region
          %367 = vsyncadd [#allocation13], 0
          %s368 = sshll.u32 %s9, 4
          %s369 = int_to_ptr.hbm [resolvable:$true] %s368
          %s370 = sshll.u32 [#allocation14], 4
          %s371 = int_to_ptr.vmem [resolvable:$true] %s370
          %376 = dma.hbm_to_vmem [thread:$0]  %s369, 1024, %s371, [#allocation13], 128, 128, 8
        $region40: #{tpu_custom_call.1} parent=11 // pred_fallthru
          _
        // Predicated region
        $region41: #{tpu_custom_call.1} parent=11 // pred_check
          %p377 = pneg %p271
        $region42: #{tpu_custom_call.1} parent=11 // pred_check_branch
          %379 = sbr.rel (%p377) target = $region44
        $region43: #{tpu_custom_call.1} parent=11 // pred_region
          _
        $region44: #{tpu_custom_call.1} parent=11 // pred_fallthru
          _
      $region12: #{tpu_custom_call.1} parent=5 // pred_fallthru
        _
      %p380 = scmp.lt.s32.totalorder %s25, 2
      // Predicated region
      $region45: #{tpu_custom_call.1} parent=5 // pred_check
        %p381 = pneg %p380
      $region46: #{tpu_custom_call.1} parent=5 // pred_check_branch
        %383 = sbr.rel (%p381) target = $region48
      $region47: #{tpu_custom_call.1} parent=5 // pred_region
        // Predicated region
        $region49: #{tpu_custom_call.1} parent=47 // pred_check
          %p384 = pneg %p45
        $region50: #{tpu_custom_call.1} parent=47 // pred_check_branch
          %386 = sbr.rel (%p384) target = $region52
        $region51: #{tpu_custom_call.1} parent=47 // pred_region
          %p387 = scmp.lt.s32.totalorder %s25, 1
          %s388 = scalar_select %p387, %s25, 1
          %s389 = smul.addr %s388, 8
          %s390 = smul.addr %s389, 8
          %s391 = scalar_lea.vmem %s0, %s390
        $region52: #{tpu_custom_call.1} parent=47 // pred_fallthru
          _
        // Predicated region
        $region53: #{tpu_custom_call.1} parent=47 // pred_check
          %p392 = pneg %p71
        $region54: #{tpu_custom_call.1} parent=47 // pred_check_branch
          %394 = sbr.rel (%p392) target = $region56
        $region55: #{tpu_custom_call.1} parent=47 // pred_region
          %p395 = scmp.lt.s32.totalorder %s25, 1
          %s396 = scalar_select %p395, %s25, 1
          %s397 = smul.addr %s396, 8
          %s398 = smul.addr %s397, 8
          %s399 = scalar_lea.vmem %s1, %s398
        $region56: #{tpu_custom_call.1} parent=47 // pred_fallthru
          _
        // Predicated region
        $region57: #{tpu_custom_call.1} parent=47 // pred_check
          %p400 = pneg %p97
        $region58: #{tpu_custom_call.1} parent=47 // pred_check_branch
          %402 = sbr.rel (%p400) target = $region60
        $region59: #{tpu_custom_call.1} parent=47 // pred_region
          %s403 = sand.u32 %s87, 1
          %s404 = scalar_lea.sflag [#allocation7], %s403
          %s405 = sand.u32 %s87, 1
          %s406 = smul.addr %s405, 64
          %s407 = scalar_lea.vmem [#allocation6], %s406
          %409 = vsyncadd %s404, 0
          %s410 = smul.addr %s25, 8
          %s411 = smul.addr %s410, 8
          %s412 = scalar_lea.hbm %s2, %s411
          %s413 = sshll.u32 %s412, 4
          %s414 = int_to_ptr.hbm [resolvable:$true] %s413
          %s415 = sshll.u32 %s407, 4
          %s416 = int_to_ptr.vmem [resolvable:$true] %s415
          %421 = dma.hbm_to_vmem [thread:$0]  %s414, 1024, %s416, %s404, 128, 128, 8
        $region60: #{tpu_custom_call.1} parent=47 // pred_fallthru
          _
      $region48: #{tpu_custom_call.1} parent=5 // pred_fallthru
        _
      %p422 = scmp.le.s32.totalorder 1, %s25
      %p423 = scmp.lt.s32.totalorder %s25, 3
      %p424 = pnand %p422, %p423
      %p425 = pneg %p424
      // Predicated region
      $region61: #{tpu_custom_call.1} parent=5 // pred_check
        _
      $region62: #{tpu_custom_call.1} parent=5 // pred_check_branch
        %427 = sbr.rel (%p424) target = $region64
      $region63: #{tpu_custom_call.1} parent=5 // pred_region
        %s428 = ssub.s32 %s25, 1
        %s429 = sand.u32 %s90, 1
        %s430 = scalar_lea.sflag [#allocation7], %s429
        %s431 = sand.u32 %s90, 1
        %s432 = smul.addr %s431, 64
        %s433 = scalar_lea.vmem [#allocation6], %s432
        // Predicated region
        $region65: #{tpu_custom_call.1} parent=63 // pred_check
          %p434 = pneg %p103
        $region66: #{tpu_custom_call.1} parent=63 // pred_check_branch
          %436 = sbr.rel (%p434) target = $region68
        $region67: #{tpu_custom_call.1} parent=63 // pred_region
          %438 = dma.done %s430, 1024
        $region68: #{tpu_custom_call.1} parent=63 // pred_fallthru
          _
        // Predicated region
        $region69: #{tpu_custom_call.1} parent=63 // pred_check
          %p439 = pneg %p124
        $region70: #{tpu_custom_call.1} parent=63 // pred_check_branch
          %441 = sbr.rel (%p439) target = $region72
        $region71: #{tpu_custom_call.1} parent=63 // pred_region
          %443 = dma.done [#allocation10], 1024
        $region72: #{tpu_custom_call.1} parent=63 // pred_fallthru
          _
        // Predicated region
        $region73: #{tpu_custom_call.1} parent=63 // pred_check
          %p444 = pneg %p166
        $region74: #{tpu_custom_call.1} parent=63 // pred_check_branch
          %446 = sbr.rel (%p444) target = $region76
        $region75: #{tpu_custom_call.1} parent=63 // pred_region
          %448 = dma.done [#allocation10], 1024
        $region76: #{tpu_custom_call.1} parent=63 // pred_fallthru
          _
        // Predicated region
        $region77: #{tpu_custom_call.1} parent=63 // pred_check
          %p449 = pneg %p208
        $region78: #{tpu_custom_call.1} parent=63 // pred_check_branch
          %451 = sbr.rel (%p449) target = $region80
        $region79: #{tpu_custom_call.1} parent=63 // pred_region
          %453 = dma.done [#allocation13], 1024
        $region80: #{tpu_custom_call.1} parent=63 // pred_fallthru
          _
        // Predicated region
        $region81: #{tpu_custom_call.1} parent=63 // pred_check
          %p454 = pneg %p250
        $region82: #{tpu_custom_call.1} parent=63 // pred_check_branch
          %456 = sbr.rel (%p454) target = $region84
        $region83: #{tpu_custom_call.1} parent=63 // pred_region
          %458 = dma.done [#allocation13], 1024
        $region84: #{tpu_custom_call.1} parent=63 // pred_fallthru
          _
        %p459 = scmp.lt.s32.totalorder %s30, 1
        %s460 = scalar_select %p459, %s30, 1
        %s461 = smul.addr %s460, 8
        %s462 = smul.addr %s461, 8
        %s463 = scalar_lea.vmem %s0, %s462
        %p464 = pneg %p51
        %p465 = pneg %p48
        %p466 = scmp.lt.s32.totalorder %s30, 1
        %s467 = scalar_select %p466, %s30, 1
        %s468 = smul.addr %s467, 8
        %s469 = smul.addr %s468, 8
        %s470 = scalar_lea.vmem %s1, %s469
        %p471 = pneg %p77
        %p472 = pneg %p74
        %s473 = sand.u32 %s90, 1
        %s474 = scalar_lea.sflag [#allocation7], %s473
        %s475 = sand.u32 %s90, 1
        %s476 = smul.addr %s475, 64
        %s477 = scalar_lea.vmem [#allocation6], %s476
        %p478 = pneg %p103
        %p479 = pneg %p100
        %p480 = pneg %p124
        %p481 = pneg %p121
        %p482 = pneg %p145
        %p483 = pneg %p142
        %p484 = pneg %p166
        %p485 = pneg %p163
        %p486 = pneg %p187
        %p487 = pneg %p184
        %p488 = pneg %p208
        %p489 = pneg %p205
        %p490 = pneg %p229
        %p491 = pneg %p226
        %p492 = pneg %p250
        %p493 = pneg %p247
        %p494 = pneg %p271
        %p495 = pneg %p268
        %p496 = pneg %p297
        %p497 = pneg %p294
        %s498 = sand.u32 %s284, 1
        %s499 = scalar_lea.sflag [#allocation8], %s498
        %s500 = sand.u32 %s284, 1
        %s501 = smul.addr %s500, 64
        %s502 = scalar_lea.vmem [#allocation15], %s501
        %p503 = scmp.lt.s32.totalorder %s30, 1
        %s504 = scalar_select %p503, %s30, 1
        %s505 = smul.addr %s504, 8
        %s506 = smul.addr %s505, 8
        %s507 = scalar_lea.vmem %s0, %s506
        %p508 = scmp.lt.s32.totalorder %s30, 1
        %s509 = scalar_select %p508, %s30, 1
        %s510 = smul.addr %s509, 8
        %s511 = smul.addr %s510, 8
        %s512 = scalar_lea.vmem %s1, %s511
        %v514 = vld [vmem:[%s507] sm:$0xff]
        %v515 = vld [vmem:[%s507 + $0x8] sm:$0xff]
        %v516 = vld [vmem:[%s507 + $0x10] sm:$0xff]
        %v517 = vld [vmem:[%s507 + $0x18] sm:$0xff]
        %v518 = vld [vmem:[%s507 + $0x20] sm:$0xff]
        %v519 = vld [vmem:[%s507 + $0x28] sm:$0xff]
        %v520 = vld [vmem:[%s507 + $0x30] sm:$0xff]
        %v521 = vld [vmem:[%s507 + $0x38] sm:$0xff]
        %v522 = vld [vmem:[%s512] sm:$0xff]
        %v523 = vld [vmem:[%s512 + $0x8] sm:$0xff]
        %v524 = vld [vmem:[%s512 + $0x10] sm:$0xff]
        %v525 = vld [vmem:[%s512 + $0x18] sm:$0xff]
        %v526 = vld [vmem:[%s512 + $0x20] sm:$0xff]
        %v527 = vld [vmem:[%s512 + $0x28] sm:$0xff]
        %v528 = vld [vmem:[%s512 + $0x30] sm:$0xff]
        %v529 = vld [vmem:[%s512 + $0x38] sm:$0xff]
        %v530 = vld [vmem:[%s433] sm:$0xff]
        %v531 = vld [vmem:[%s433 + $0x8] sm:$0xff]
        %v532 = vld [vmem:[%s433 + $0x10] sm:$0xff]
        %v533 = vld [vmem:[%s433 + $0x18] sm:$0xff]
        %v534 = vld [vmem:[%s433 + $0x20] sm:$0xff]
        %v535 = vld [vmem:[%s433 + $0x28] sm:$0xff]
        %v536 = vld [vmem:[%s433 + $0x30] sm:$0xff]
        %v537 = vld [vmem:[%s433 + $0x38] sm:$0xff]
        %v538 = vld [vmem:[#allocation9] sm:$0xff]
        %v539 = vld [vmem:[#allocation9 + $0x8] sm:$0xff]
        %v540 = vld [vmem:[#allocation9 + $0x10] sm:$0xff]
        %v541 = vld [vmem:[#allocation9 + $0x18] sm:$0xff]
        %v542 = vld [vmem:[#allocation9 + $0x20] sm:$0xff]
        %v543 = vld [vmem:[#allocation9 + $0x28] sm:$0xff]
        %v544 = vld [vmem:[#allocation9 + $0x30] sm:$0xff]
        %v545 = vld [vmem:[#allocation9 + $0x38] sm:$0xff]
        %v546 = vld [vmem:[%s4] sm:$0xff]
        %v547 = vld [vmem:[%s4 + $0x8] sm:$0xff]
        %v548 = vld [vmem:[%s4 + $0x10] sm:$0xff]
        %v549 = vld [vmem:[%s4 + $0x18] sm:$0xff]
        %v550 = vld [vmem:[%s4 + $0x20] sm:$0xff]
        %v551 = vld [vmem:[%s4 + $0x28] sm:$0xff]
        %v552 = vld [vmem:[%s4 + $0x30] sm:$0xff]
        %v553 = vld [vmem:[%s4 + $0x38] sm:$0xff]
        %555 = vset.pattern.permute.xlu0 0
        %556 = vperm.xlu0 %555, %v546
        %v557 = vpop.permute.xlu0 %556
        %560 = vset.pattern.permute.xlu0 0
        %561 = vperm.xlu0 %560, %v547
        %v562 = vpop.permute.xlu0 %561
        %565 = vset.pattern.permute.xlu0 0
        %566 = vperm.xlu0 %565, %v548
        %v567 = vpop.permute.xlu0 %566
        %570 = vset.pattern.permute.xlu0 0
        %571 = vperm.xlu0 %570, %v549
        %v572 = vpop.permute.xlu0 %571
        %575 = vset.pattern.permute.xlu0 0
        %576 = vperm.xlu0 %575, %v550
        %v577 = vpop.permute.xlu0 %576
        %580 = vset.pattern.permute.xlu0 0
        %581 = vperm.xlu0 %580, %v551
        %v582 = vpop.permute.xlu0 %581
        %585 = vset.pattern.permute.xlu0 0
        %586 = vperm.xlu0 %585, %v552
        %v587 = vpop.permute.xlu0 %586
        %590 = vset.pattern.permute.xlu0 0
        %591 = vperm.xlu0 %590, %v553
        %v592 = vpop.permute.xlu0 %591
        %vm594 = vcmask 523264
        %v596 = vsel %vm594, %v538, 0
        %v599 = vsel %vm594, %v539, 0
        %v602 = vsel %vm594, %v540, 0
        %v605 = vsel %vm594, %v541, 0
        %v608 = vsel %vm594, %v542, 0
        %v611 = vsel %vm594, %v543, 0
        %v614 = vsel %vm594, %v544, 0
        %v617 = vsel %vm594, %v545, 0
        %619 = vmatpush.msra.mxu0 0.0
        %620 = vmatpush.msra.mxu0 0.0
        %621 = vmatpush.msra.mxu0 0.0
        %622 = vmatpush.msra.mxu0 0.0
        %623 = vmatpush.msra.mxu0 0.0
        %624 = vmatpush.msra.mxu0 0.0
        %625 = vmatpush.msra.mxu0 0.0
        %626 = vmatpush.msra.mxu0 0.0
        %627 = vmatpush.msra.mxu0 %v521
        %628 = vmatpush.msra.mxu0 %v520
        %629 = vmatpush.msra.mxu0 %v519
        %630 = vmatpush.msra.mxu0 %v518
        %631 = vmatpush.msra.mxu0 %v517
        %632 = vmatpush.msra.mxu0 %v516
        %633 = vmatpush.msra.mxu0 %v515
        %634 = vmatpush.msra.mxu0 %v514
        %635 = vmatmul.f32.gmra.mxu0 %v596
        %v636 = vpop.f32.mrf.mxu0
        %v637 = vadd.f32 %v557, %v636
        %638 = vmatmul.f32.gmra.mxu0 %v599
        %v639 = vpop.f32.mrf.mxu0
        %v640 = vadd.f32 %v562, %v639
        %641 = vmatmul.f32.gmra.mxu0 %v602
        %v642 = vpop.f32.mrf.mxu0
        %v643 = vadd.f32 %v567, %v642
        %644 = vmatmul.f32.gmra.mxu0 %v605
        %v645 = vpop.f32.mrf.mxu0
        %v646 = vadd.f32 %v572, %v645
        %647 = vmatmul.f32.gmra.mxu0 %v608
        %v648 = vpop.f32.mrf.mxu0
        %v649 = vadd.f32 %v577, %v648
        %650 = vmatmul.f32.gmra.mxu0 %v611
        %v651 = vpop.f32.mrf.mxu0
        %v652 = vadd.f32 %v582, %v651
        %653 = vmatmul.f32.gmra.mxu0 %v614
        %v654 = vpop.f32.mrf.mxu0
        %v655 = vadd.f32 %v587, %v654
        %656 = vmatmul.f32.gmra.mxu0 %v617
        %v657 = vpop.f32.mrf.mxu0
        %v658 = vadd.f32 %v592, %v657
        %659 = vdwg.mxu0
        %v660 = vmul.f32 %v637, 0.25
        %v661 = vmul.f32 %v640, 0.25
        %v662 = vmul.f32 %v643, 0.25
        %v663 = vmul.f32 %v646, 0.25
        %v664 = vmul.f32 %v649, 0.25
        %v665 = vmul.f32 %v652, 0.25
        %v666 = vmul.f32 %v655, 0.25
        %v667 = vmul.f32 %v658, 0.25
        %v668 = vpack.c.bf16 %v660, %v660
        %v669 = vpack.c.bf16 %v661, %v661
        %v670 = vpack.c.bf16 %v662, %v662
        %v671 = vpack.c.bf16 %v663, %v663
        %v672 = vpack.c.bf16 %v664, %v664
        %v673 = vpack.c.bf16 %v665, %v665
        %v674 = vpack.c.bf16 %v666, %v666
        %v675 = vpack.c.bf16 %v667, %v667
        %676 = vst [vmem:[#allocation2] sm:$0xf] %v668
        %677 = vst [vmem:[#allocation2 + $0x4] sm:$0xf] %v669
        %678 = vst [vmem:[#allocation2 + $0x8] sm:$0xf] %v670
        %679 = vst [vmem:[#allocation2 + $0xc] sm:$0xf] %v671
        %680 = vst [vmem:[#allocation2 + $0x10] sm:$0xf] %v672
        %681 = vst [vmem:[#allocation2 + $0x14] sm:$0xf] %v673
        %682 = vst [vmem:[#allocation2 + $0x18] sm:$0xf] %v674
        %683 = vst [vmem:[#allocation2 + $0x1c] sm:$0xf] %v675
        %v684 = vld [vmem:[#allocation11] sm:$0xff]
        %v685 = vld [vmem:[#allocation11 + $0x8] sm:$0xff]
        %v686 = vld [vmem:[#allocation11 + $0x10] sm:$0xff]
        %v687 = vld [vmem:[#allocation11 + $0x18] sm:$0xff]
        %v688 = vld [vmem:[#allocation11 + $0x20] sm:$0xff]
        %v689 = vld [vmem:[#allocation11 + $0x28] sm:$0xff]
        %v690 = vld [vmem:[#allocation11 + $0x30] sm:$0xff]
        %v691 = vld [vmem:[#allocation11 + $0x38] sm:$0xff]
        %v692 = vld [vmem:[%s6] sm:$0xff]
        %v693 = vld [vmem:[%s6 + $0x8] sm:$0xff]
        %v694 = vld [vmem:[%s6 + $0x10] sm:$0xff]
        %v695 = vld [vmem:[%s6 + $0x18] sm:$0xff]
        %v696 = vld [vmem:[%s6 + $0x20] sm:$0xff]
        %v697 = vld [vmem:[%s6 + $0x28] sm:$0xff]
        %v698 = vld [vmem:[%s6 + $0x30] sm:$0xff]
        %v699 = vld [vmem:[%s6 + $0x38] sm:$0xff]
        %701 = vset.pattern.permute.xlu0 0
        %702 = vperm.xlu0 %701, %v692
        %v703 = vpop.permute.xlu0 %702
        %706 = vset.pattern.permute.xlu0 0
        %707 = vperm.xlu0 %706, %v693
        %v708 = vpop.permute.xlu0 %707
        %711 = vset.pattern.permute.xlu0 0
        %712 = vperm.xlu0 %711, %v694
        %v713 = vpop.permute.xlu0 %712
        %716 = vset.pattern.permute.xlu0 0
        %717 = vperm.xlu0 %716, %v695
        %v718 = vpop.permute.xlu0 %717
        %721 = vset.pattern.permute.xlu0 0
        %722 = vperm.xlu0 %721, %v696
        %v723 = vpop.permute.xlu0 %722
        %726 = vset.pattern.permute.xlu0 0
        %727 = vperm.xlu0 %726, %v697
        %v728 = vpop.permute.xlu0 %727
        %731 = vset.pattern.permute.xlu0 0
        %732 = vperm.xlu0 %731, %v698
        %v733 = vpop.permute.xlu0 %732
        %736 = vset.pattern.permute.xlu0 0
        %737 = vperm.xlu0 %736, %v699
        %v738 = vpop.permute.xlu0 %737
        %v741 = vsel %vm594, %v684, 0
        %v744 = vsel %vm594, %v685, 0
        %v747 = vsel %vm594, %v686, 0
        %v750 = vsel %vm594, %v687, 0
        %v753 = vsel %vm594, %v688, 0
        %v756 = vsel %vm594, %v689, 0
        %v759 = vsel %vm594, %v690, 0
        %v762 = vsel %vm594, %v691, 0
        %764 = vmatpush.msra.mxu0 0.0
        %765 = vmatpush.msra.mxu0 0.0
        %766 = vmatpush.msra.mxu0 0.0
        %767 = vmatpush.msra.mxu0 0.0
        %768 = vmatpush.msra.mxu0 0.0
        %769 = vmatpush.msra.mxu0 0.0
        %770 = vmatpush.msra.mxu0 0.0
        %771 = vmatpush.msra.mxu0 0.0
        %772 = vmatpush.msra.mxu0 %v529
        %773 = vmatpush.msra.mxu0 %v528
        %774 = vmatpush.msra.mxu0 %v527
        %775 = vmatpush.msra.mxu0 %v526
        %776 = vmatpush.msra.mxu0 %v525
        %777 = vmatpush.msra.mxu0 %v524
        %778 = vmatpush.msra.mxu0 %v523
        %779 = vmatpush.msra.mxu0 %v522
        %780 = vmatmul.f32.gmra.mxu0 %v741
        %v781 = vpop.f32.mrf.mxu0
        %v782 = vadd.f32 %v703, %v781
        %783 = vmatmul.f32.gmra.mxu0 %v744
        %v784 = vpop.f32.mrf.mxu0
        %v785 = vadd.f32 %v708, %v784
        %786 = vmatmul.f32.gmra.mxu0 %v747
        %v787 = vpop.f32.mrf.mxu0
        %v788 = vadd.f32 %v713, %v787
        %789 = vmatmul.f32.gmra.mxu0 %v750
        %v790 = vpop.f32.mrf.mxu0
        %v791 = vadd.f32 %v718, %v790
        %792 = vmatmul.f32.gmra.mxu0 %v753
        %v793 = vpop.f32.mrf.mxu0
        %v794 = vadd.f32 %v723, %v793
        %795 = vmatmul.f32.gmra.mxu0 %v756
        %v796 = vpop.f32.mrf.mxu0
        %v797 = vadd.f32 %v728, %v796
        %798 = vmatmul.f32.gmra.mxu0 %v759
        %v799 = vpop.f32.mrf.mxu0
        %v800 = vadd.f32 %v733, %v799
        %801 = vmatmul.f32.gmra.mxu0 %v762
        %v802 = vpop.f32.mrf.mxu0
        %v803 = vadd.f32 %v738, %v802
        %804 = vdwg.mxu0
        %v805 = vpack.c.bf16 %v782, %v782
        %v806 = vpack.c.bf16 %v785, %v785
        %v807 = vpack.c.bf16 %v788, %v788
        %v808 = vpack.c.bf16 %v791, %v791
        %v809 = vpack.c.bf16 %v794, %v794
        %v810 = vpack.c.bf16 %v797, %v797
        %v811 = vpack.c.bf16 %v800, %v800
        %v812 = vpack.c.bf16 %v803, %v803
        %813 = vst [vmem:[#allocation3] sm:$0xf] %v805
        %814 = vst [vmem:[#allocation3 + $0x4] sm:$0xf] %v806
        %815 = vst [vmem:[#allocation3 + $0x8] sm:$0xf] %v807
        %816 = vst [vmem:[#allocation3 + $0xc] sm:$0xf] %v808
        %817 = vst [vmem:[#allocation3 + $0x10] sm:$0xf] %v809
        %818 = vst [vmem:[#allocation3 + $0x14] sm:$0xf] %v810
        %819 = vst [vmem:[#allocation3 + $0x18] sm:$0xf] %v811
        %820 = vst [vmem:[#allocation3 + $0x1c] sm:$0xf] %v812
        %v821 = vld [vmem:[#allocation12] sm:$0xff]
        %v822 = vld [vmem:[#allocation12 + $0x8] sm:$0xff]
        %v823 = vld [vmem:[#allocation12 + $0x10] sm:$0xff]
        %v824 = vld [vmem:[#allocation12 + $0x18] sm:$0xff]
        %v825 = vld [vmem:[#allocation12 + $0x20] sm:$0xff]
        %v826 = vld [vmem:[#allocation12 + $0x28] sm:$0xff]
        %v827 = vld [vmem:[#allocation12 + $0x30] sm:$0xff]
        %v828 = vld [vmem:[#allocation12 + $0x38] sm:$0xff]
        %v829 = vld [vmem:[%s8] sm:$0xff]
        %v830 = vld [vmem:[%s8 + $0x8] sm:$0xff]
        %v831 = vld [vmem:[%s8 + $0x10] sm:$0xff]
        %v832 = vld [vmem:[%s8 + $0x18] sm:$0xff]
        %v833 = vld [vmem:[%s8 + $0x20] sm:$0xff]
        %v834 = vld [vmem:[%s8 + $0x28] sm:$0xff]
        %v835 = vld [vmem:[%s8 + $0x30] sm:$0xff]
        %v836 = vld [vmem:[%s8 + $0x38] sm:$0xff]
        %838 = vset.pattern.permute.xlu0 0
        %839 = vperm.xlu0 %838, %v829
        %v840 = vpop.permute.xlu0 %839
        %843 = vset.pattern.permute.xlu0 0
        %844 = vperm.xlu0 %843, %v830
        %v845 = vpop.permute.xlu0 %844
        %848 = vset.pattern.permute.xlu0 0
        %849 = vperm.xlu0 %848, %v831
        %v850 = vpop.permute.xlu0 %849
        %853 = vset.pattern.permute.xlu0 0
        %854 = vperm.xlu0 %853, %v832
        %v855 = vpop.permute.xlu0 %854
        %858 = vset.pattern.permute.xlu0 0
        %859 = vperm.xlu0 %858, %v833
        %v860 = vpop.permute.xlu0 %859
        %863 = vset.pattern.permute.xlu0 0
        %864 = vperm.xlu0 %863, %v834
        %v865 = vpop.permute.xlu0 %864
        %868 = vset.pattern.permute.xlu0 0
        %869 = vperm.xlu0 %868, %v835
        %v870 = vpop.permute.xlu0 %869
        %873 = vset.pattern.permute.xlu0 0
        %874 = vperm.xlu0 %873, %v836
        %v875 = vpop.permute.xlu0 %874
        %v878 = vsel %vm594, %v821, 0
        %v881 = vsel %vm594, %v822, 0
        %v884 = vsel %vm594, %v823, 0
        %v887 = vsel %vm594, %v824, 0
        %v890 = vsel %vm594, %v825, 0
        %v893 = vsel %vm594, %v826, 0
        %v896 = vsel %vm594, %v827, 0
        %v899 = vsel %vm594, %v828, 0
        %901 = vmatpush.msra.mxu0 0.0
        %902 = vmatpush.msra.mxu0 0.0
        %903 = vmatpush.msra.mxu0 0.0
        %904 = vmatpush.msra.mxu0 0.0
        %905 = vmatpush.msra.mxu0 0.0
        %906 = vmatpush.msra.mxu0 0.0
        %907 = vmatpush.msra.mxu0 0.0
        %908 = vmatpush.msra.mxu0 0.0
        %909 = vmatpush.msra.mxu0 %v537
        %910 = vmatpush.msra.mxu0 %v536
        %911 = vmatpush.msra.mxu0 %v535
        %912 = vmatpush.msra.mxu0 %v534
        %913 = vmatpush.msra.mxu0 %v533
        %914 = vmatpush.msra.mxu0 %v532
        %915 = vmatpush.msra.mxu0 %v531
        %916 = vmatpush.msra.mxu0 %v530
        %917 = vmatmul.f32.gmra.mxu0 %v878
        %v918 = vpop.f32.mrf.mxu0
        %v919 = vadd.f32 %v840, %v918
        %920 = vmatmul.f32.gmra.mxu0 %v881
        %v921 = vpop.f32.mrf.mxu0
        %v922 = vadd.f32 %v845, %v921
        %923 = vmatmul.f32.gmra.mxu0 %v884
        %v924 = vpop.f32.mrf.mxu0
        %v925 = vadd.f32 %v850, %v924
        %926 = vmatmul.f32.gmra.mxu0 %v887
        %v927 = vpop.f32.mrf.mxu0
        %v928 = vadd.f32 %v855, %v927
        %929 = vmatmul.f32.gmra.mxu0 %v890
        %v930 = vpop.f32.mrf.mxu0
        %v931 = vadd.f32 %v860, %v930
        %932 = vmatmul.f32.gmra.mxu0 %v893
        %v933 = vpop.f32.mrf.mxu0
        %v934 = vadd.f32 %v865, %v933
        %935 = vmatmul.f32.gmra.mxu0 %v896
        %v936 = vpop.f32.mrf.mxu0
        %v937 = vadd.f32 %v870, %v936
        %938 = vmatmul.f32.gmra.mxu0 %v899
        %v939 = vpop.f32.mrf.mxu0
        %v940 = vadd.f32 %v875, %v939
        %941 = vdwg.mxu0
        %v942 = vpack.c.bf16 %v919, %v919
        %v943 = vpack.c.bf16 %v922, %v922
        %v944 = vpack.c.bf16 %v925, %v925
        %v945 = vpack.c.bf16 %v928, %v928
        %v946 = vpack.c.bf16 %v931, %v931
        %v947 = vpack.c.bf16 %v934, %v934
        %v948 = vpack.c.bf16 %v937, %v937
        %v949 = vpack.c.bf16 %v940, %v940
        %950 = vst [vmem:[#allocation4] sm:$0xf] %v942
        %951 = vst [vmem:[#allocation4 + $0x4] sm:$0xf] %v943
        %952 = vst [vmem:[#allocation4 + $0x8] sm:$0xf] %v944
        %953 = vst [vmem:[#allocation4 + $0xc] sm:$0xf] %v945
        %954 = vst [vmem:[#allocation4 + $0x10] sm:$0xf] %v946
        %955 = vst [vmem:[#allocation4 + $0x14] sm:$0xf] %v947
        %956 = vst [vmem:[#allocation4 + $0x18] sm:$0xf] %v948
        %957 = vst [vmem:[#allocation4 + $0x1c] sm:$0xf] %v949
        loop: start=0, step=1, limit=4
        $region85: #{tpu_custom_call.1} parent=63 // loop_pre_header
          _
        $region86: #{tpu_custom_call.1} parent=63 // loop_header
          %s959 = sphi 0, %s963
          %p960 = scmp.ge.s32.totalorder %s959, 4
        $region87: #{tpu_custom_call.1} parent=63 // loop_header_branch
          %962 = sbr.rel (%p960) target = $region91
        $region88: #{tpu_custom_call.1} parent=63 // loop_body
          %s964 = smul.u32 %s959, 16
          %s965 = sshra.s32 %s964, 3
          %s966 = sand.u32 %s964, 7
          %s967 = smul.addr %s965, 4
          %s968 = scalar_lea.vmem [#allocation2], %s967
          %v969 = vld [vmem:[%s968] sm:$0xf]
          %v970 = vld [vmem:[%s968 + $0x4] sm:$0xf]
          %s971 = smul.addr %s965, 4
          %s972 = scalar_lea.vmem [#allocation3], %s971
          %v973 = vld [vmem:[%s972] sm:$0xf]
          %v974 = vld [vmem:[%s972 + $0x4] sm:$0xf]
          %s975 = smul.addr %s965, 4
          %s976 = scalar_lea.vmem [#allocation4], %s975
          %v977 = vld [vmem:[%s976] sm:$0xf]
          %v978 = vld [vmem:[%s976 + $0x4] sm:$0xf]
          %v981 = vunpack.c.l.b16 %v969
          %v982 = vunpack.c.l.b16 %v970
          %v983 = vpack.c.b16 %v982, %v981
          %985 = vxpose.xlu0.c.b16.start [1/8] %v983, 128
          %986 = vxpose.xlu0.c.b16.cont [2/8] 0, 128
          %987 = vxpose.xlu0.c.b16.cont [3/8] 0, 128
          %988 = vxpose.xlu0.c.b16.cont [4/8] 0, 128
          %989 = vxpose.xlu0.c.b16.cont [5/8] 0, 128
          %990 = vxpose.xlu0.c.b16.cont [6/8] 0, 128
          %991 = vxpose.xlu0.c.b16.cont [7/8] 0, 128
          %992 = vxpose.xlu0.c.b16.end [8/8] 0, 128
          %v993 = vpop.trf.xlu0
          %v994 = vpop.trf.xlu0
          %v995 = vpop.trf.xlu0
          %v996 = vpop.trf.xlu0
          %v997 = vpop.trf.xlu0
          %v998 = vpop.trf.xlu0
          %v999 = vpop.trf.xlu0
          %v1000 = vpop.trf.xlu0
          %v1003 = vunpack.c.l.b16 %v973
          %v1004 = vunpack.c.l.b16 %v974
          %v1005 = vpack.c.b16 %v1004, %v1003
          %vm1007 = vcmask 130048
          %v1009 = vsel %vm1007, %v993, 0
          %v1012 = vsel %vm1007, %v994, 0
          %v1015 = vsel %vm1007, %v995, 0
          %v1018 = vsel %vm1007, %v996, 0
          %v1021 = vsel %vm1007, %v997, 0
          %v1024 = vsel %vm1007, %v998, 0
          %v1027 = vsel %vm1007, %v999, 0
          %v1030 = vsel %vm1007, %v1000, 0
          %1032 = vmatpush.bf16.msra.mxu0 0
          %1033 = vmatpush.bf16.msra.mxu0 0
          %1034 = vmatpush.bf16.msra.mxu0 0
          %1035 = vmatpush.bf16.msra.mxu0 0
          %1036 = vmatpush.bf16.msra.mxu0 0
          %1037 = vmatpush.bf16.msra.mxu0 0
          %1038 = vmatpush.bf16.msra.mxu0 0
          %1039 = vmatpush.bf16.msra.mxu0 %v1005
          %1040 = vmatmul.bf16.gmra.mxu0 %v1009
          %v1041 = vpop.f32.mrf.mxu0
          %v1042 = vadd.f32 0.0, %v1041
          %v1043 = vpop.f32.mrf.mxu0
          %v1044 = vadd.f32 0.0, %v1043
          %1045 = vmatmul.bf16.gmra.mxu0 %v1012
          %v1046 = vpop.f32.mrf.mxu0
          %v1047 = vadd.f32 0.0, %v1046
          %v1048 = vpop.f32.mrf.mxu0
          %v1049 = vadd.f32 0.0, %v1048
          %1050 = vmatmul.bf16.gmra.mxu0 %v1015
          %v1051 = vpop.f32.mrf.mxu0
          %v1052 = vadd.f32 0.0, %v1051
          %v1053 = vpop.f32.mrf.mxu0
          %v1054 = vadd.f32 0.0, %v1053
          %1055 = vmatmul.bf16.gmra.mxu0 %v1018
          %v1056 = vpop.f32.mrf.mxu0
          %v1057 = vadd.f32 0.0, %v1056
          %v1058 = vpop.f32.mrf.mxu0
          %v1059 = vadd.f32 0.0, %v1058
          %1060 = vmatmul.bf16.gmra.mxu0 %v1021
          %v1061 = vpop.f32.mrf.mxu0
          %v1062 = vadd.f32 0.0, %v1061
          %v1063 = vpop.f32.mrf.mxu0
          %v1064 = vadd.f32 0.0, %v1063
          %1065 = vmatmul.bf16.gmra.mxu0 %v1024
          %v1066 = vpop.f32.mrf.mxu0
          %v1067 = vadd.f32 0.0, %v1066
          %v1068 = vpop.f32.mrf.mxu0
          %v1069 = vadd.f32 0.0, %v1068
          %1070 = vmatmul.bf16.gmra.mxu0 %v1027
          %v1071 = vpop.f32.mrf.mxu0
          %v1072 = vadd.f32 0.0, %v1071
          %v1073 = vpop.f32.mrf.mxu0
          %v1074 = vadd.f32 0.0, %v1073
          %1075 = vmatmul.bf16.gmra.mxu0 %v1030
          %v1076 = vpop.f32.mrf.mxu0
          %v1077 = vadd.f32 0.0, %v1076
          %v1078 = vpop.f32.mrf.mxu0
          %v1079 = vadd.f32 0.0, %v1078
          %1080 = vdwg.mxu0
          %1081 = vmax.xlane.f32.xlu0 %v1042
          %v1082 = vpop.xlane.xlu0 %1081
          %1083 = vmax.xlane.f32.xlu0 %v1044
          %v1084 = vpop.xlane.xlu0 %1083
          %1085 = vmax.xlane.f32.xlu0 %v1047
          %v1086 = vpop.xlane.xlu0 %1085
          %1087 = vmax.xlane.f32.xlu0 %v1049
          %v1088 = vpop.xlane.xlu0 %1087
          %1089 = vmax.xlane.f32.xlu0 %v1052
          %v1090 = vpop.xlane.xlu0 %1089
          %1091 = vmax.xlane.f32.xlu0 %v1054
          %v1092 = vpop.xlane.xlu0 %1091
          %1093 = vmax.xlane.f32.xlu0 %v1057
          %v1094 = vpop.xlane.xlu0 %1093
          %1095 = vmax.xlane.f32.xlu0 %v1059
          %v1096 = vpop.xlane.xlu0 %1095
          %1097 = vmax.xlane.f32.xlu0 %v1062
          %v1098 = vpop.xlane.xlu0 %1097
          %1099 = vmax.xlane.f32.xlu0 %v1064
          %v1100 = vpop.xlane.xlu0 %1099
          %1101 = vmax.xlane.f32.xlu0 %v1067
          %v1102 = vpop.xlane.xlu0 %1101
          %1103 = vmax.xlane.f32.xlu0 %v1069
          %v1104 = vpop.xlane.xlu0 %1103
          %1105 = vmax.xlane.f32.xlu0 %v1072
          %v1106 = vpop.xlane.xlu0 %1105
          %1107 = vmax.xlane.f32.xlu0 %v1074
          %v1108 = vpop.xlane.xlu0 %1107
          %1109 = vmax.xlane.f32.xlu0 %v1077
          %v1110 = vpop.xlane.xlu0 %1109
          %1111 = vmax.xlane.f32.xlu0 %v1079
          %v1112 = vpop.xlane.xlu0 %1111
          %v1113 = vsub.f32 %v1042, %v1082
          %v1114 = vsub.f32 %v1044, %v1084
          %v1115 = vsub.f32 %v1047, %v1086
          %v1116 = vsub.f32 %v1049, %v1088
          %v1117 = vsub.f32 %v1052, %v1090
          %v1118 = vsub.f32 %v1054, %v1092
          %v1119 = vsub.f32 %v1057, %v1094
          %v1120 = vsub.f32 %v1059, %v1096
          %v1121 = vsub.f32 %v1062, %v1098
          %v1122 = vsub.f32 %v1064, %v1100
          %v1123 = vsub.f32 %v1067, %v1102
          %v1124 = vsub.f32 %v1069, %v1104
          %v1125 = vsub.f32 %v1072, %v1106
          %v1126 = vsub.f32 %v1074, %v1108
          %v1127 = vsub.f32 %v1077, %v1110
          %v1128 = vsub.f32 %v1079, %v1112
          %v1129 = vmul.f32 %v1113, 1.442695
          %v1130 = vpow.pop %v1129
          %v1131 = vmul.f32 %v1114, 1.442695
          %v1132 = vpow.pop %v1131
          %v1133 = vmul.f32 %v1115, 1.442695
          %v1134 = vpow.pop %v1133
          %v1135 = vmul.f32 %v1116, 1.442695
          %v1136 = vpow.pop %v1135
          %v1137 = vmul.f32 %v1117, 1.442695
          %v1138 = vpow.pop %v1137
          %v1139 = vmul.f32 %v1118, 1.442695
          %v1140 = vpow.pop %v1139
          %v1141 = vmul.f32 %v1119, 1.442695
          %v1142 = vpow.pop %v1141
          %v1143 = vmul.f32 %v1120, 1.442695
          %v1144 = vpow.pop %v1143
          %v1145 = vmul.f32 %v1121, 1.442695
          %v1146 = vpow.pop %v1145
          %v1147 = vmul.f32 %v1122, 1.442695
          %v1148 = vpow.pop %v1147
          %v1149 = vmul.f32 %v1123, 1.442695
          %v1150 = vpow.pop %v1149
          %v1151 = vmul.f32 %v1124, 1.442695
          %v1152 = vpow.pop %v1151
          %v1153 = vmul.f32 %v1125, 1.442695
          %v1154 = vpow.pop %v1153
          %v1155 = vmul.f32 %v1126, 1.442695
          %v1156 = vpow.pop %v1155
          %v1157 = vmul.f32 %v1127, 1.442695
          %v1158 = vpow.pop %v1157
          %v1159 = vmul.f32 %v1128, 1.442695
          %v1160 = vpow.pop %v1159
          %1161 = vadd.xlane.f32.xlu0 %v1130
          %v1162 = vpop.xlane.xlu0 %1161
          %1163 = vadd.xlane.f32.xlu0 %v1132
          %v1164 = vpop.xlane.xlu0 %1163
          %1165 = vadd.xlane.f32.xlu0 %v1134
          %v1166 = vpop.xlane.xlu0 %1165
          %1167 = vadd.xlane.f32.xlu0 %v1136
          %v1168 = vpop.xlane.xlu0 %1167
          %1169 = vadd.xlane.f32.xlu0 %v1138
          %v1170 = vpop.xlane.xlu0 %1169
          %1171 = vadd.xlane.f32.xlu0 %v1140
          %v1172 = vpop.xlane.xlu0 %1171
          %1173 = vadd.xlane.f32.xlu0 %v1142
          %v1174 = vpop.xlane.xlu0 %1173
          %1175 = vadd.xlane.f32.xlu0 %v1144
          %v1176 = vpop.xlane.xlu0 %1175
          %1177 = vadd.xlane.f32.xlu0 %v1146
          %v1178 = vpop.xlane.xlu0 %1177
          %1179 = vadd.xlane.f32.xlu0 %v1148
          %v1180 = vpop.xlane.xlu0 %1179
          %1181 = vadd.xlane.f32.xlu0 %v1150
          %v1182 = vpop.xlane.xlu0 %1181
          %1183 = vadd.xlane.f32.xlu0 %v1152
          %v1184 = vpop.xlane.xlu0 %1183
          %1185 = vadd.xlane.f32.xlu0 %v1154
          %v1186 = vpop.xlane.xlu0 %1185
          %1187 = vadd.xlane.f32.xlu0 %v1156
          %v1188 = vpop.xlane.xlu0 %1187
          %1189 = vadd.xlane.f32.xlu0 %v1158
          %v1190 = vpop.xlane.xlu0 %1189
          %1191 = vadd.xlane.f32.xlu0 %v1160
          %v1192 = vpop.xlane.xlu0 %1191
          %v1193 = vrcp.pop %v1162
          %v1194 = vrcp.pop %v1164
          %v1195 = vrcp.pop %v1166
          %v1196 = vrcp.pop %v1168
          %v1197 = vrcp.pop %v1170
          %v1198 = vrcp.pop %v1172
          %v1199 = vrcp.pop %v1174
          %v1200 = vrcp.pop %v1176
          %v1201 = vrcp.pop %v1178
          %v1202 = vrcp.pop %v1180
          %v1203 = vrcp.pop %v1182
          %v1204 = vrcp.pop %v1184
          %v1205 = vrcp.pop %v1186
          %v1206 = vrcp.pop %v1188
          %v1207 = vrcp.pop %v1190
          %v1208 = vrcp.pop %v1192
          %v1209 = vmul.f32 %v1130, %v1193
          %v1210 = vmul.f32 %v1132, %v1194
          %v1211 = vmul.f32 %v1134, %v1195
          %v1212 = vmul.f32 %v1136, %v1196
          %v1213 = vmul.f32 %v1138, %v1197
          %v1214 = vmul.f32 %v1140, %v1198
          %v1215 = vmul.f32 %v1142, %v1199
          %v1216 = vmul.f32 %v1144, %v1200
          %v1217 = vmul.f32 %v1146, %v1201
          %v1218 = vmul.f32 %v1148, %v1202
          %v1219 = vmul.f32 %v1150, %v1203
          %v1220 = vmul.f32 %v1152, %v1204
          %v1221 = vmul.f32 %v1154, %v1205
          %v1222 = vmul.f32 %v1156, %v1206
          %v1223 = vmul.f32 %v1158, %v1207
          %v1224 = vmul.f32 %v1160, %v1208
          %v1225 = vpack.c.bf16 %v1210, %v1209
          %v1226 = vpack.c.bf16 %v1212, %v1211
          %v1227 = vpack.c.bf16 %v1214, %v1213
          %v1228 = vpack.c.bf16 %v1216, %v1215
          %v1229 = vpack.c.bf16 %v1218, %v1217
          %v1230 = vpack.c.bf16 %v1220, %v1219
          %v1231 = vpack.c.bf16 %v1222, %v1221
          %v1232 = vpack.c.bf16 %v1224, %v1223
          %v1235 = vunpack.c.l.b16 %v977
          %v1236 = vunpack.c.l.b16 %v978
          %v1237 = vpack.c.b16 %v1236, %v1235
          %1239 = vmatpush.bf16.xpose.msra.mxu0 %v1232
          %1240 = vmatpush.bf16.xpose.msra.mxu0 %v1231
          %1241 = vmatpush.bf16.xpose.msra.mxu0 %v1230
          %1242 = vmatpush.bf16.xpose.msra.mxu0 %v1229
          %1243 = vmatpush.bf16.xpose.msra.mxu0 %v1228
          %1244 = vmatpush.bf16.xpose.msra.mxu0 %v1227
          %1245 = vmatpush.bf16.xpose.msra.mxu0 %v1226
          %1246 = vmatpush.bf16.xpose.msra.mxu0 %v1225
          %1247 = vmatmul.bf16.gmra.mxu0 %v1237
          %v1248 = vpop.f32.mrf.mxu0
          %v1249 = vadd.f32 0.0, %v1248
          %v1250 = vpop.f32.mrf.mxu0
          %v1251 = vadd.f32 0.0, %v1250
          %1252 = vdwg.mxu0
          %s1253 = scalar_lea.vmem [#allocation5], %s964
          %1254 = vst [vmem:[%s1253] sm:$0xff] %v1249
          %1255 = vst [vmem:[%s1253 + $0x8] sm:$0xff] %v1251
        $region89: #{tpu_custom_call.1} parent=63 // loop_footer
          %s963 = sadd.s32 1, %s959
        $region90: #{tpu_custom_call.1} parent=63 // loop_footer_branch
          %958 = sbr.rel target = $region86
        $region91: #{tpu_custom_call.1} parent=63 // loop_exit
          _
        %v1256 = vld [vmem:[#allocation14] sm:$0xff]
        %v1257 = vld [vmem:[#allocation14 + $0x8] sm:$0xff]
        %v1258 = vld [vmem:[#allocation14 + $0x10] sm:$0xff]
        %v1259 = vld [vmem:[#allocation14 + $0x18] sm:$0xff]
        %v1260 = vld [vmem:[#allocation14 + $0x20] sm:$0xff]
        %v1261 = vld [vmem:[#allocation14 + $0x28] sm:$0xff]
        %v1262 = vld [vmem:[#allocation14 + $0x30] sm:$0xff]
        %v1263 = vld [vmem:[#allocation14 + $0x38] sm:$0xff]
        %v1264 = vld [vmem:[#allocation5] sm:$0xff]
        %v1265 = vld [vmem:[#allocation5 + $0x8] sm:$0xff]
        %v1266 = vld [vmem:[#allocation5 + $0x10] sm:$0xff]
        %v1267 = vld [vmem:[#allocation5 + $0x18] sm:$0xff]
        %v1268 = vld [vmem:[#allocation5 + $0x20] sm:$0xff]
        %v1269 = vld [vmem:[#allocation5 + $0x28] sm:$0xff]
        %v1270 = vld [vmem:[#allocation5 + $0x30] sm:$0xff]
        %v1271 = vld [vmem:[#allocation5 + $0x38] sm:$0xff]
        %v1272 = vld [vmem:[%s10] sm:$0xff]
        %v1273 = vld [vmem:[%s10 + $0x8] sm:$0xff]
        %v1274 = vld [vmem:[%s10 + $0x10] sm:$0xff]
        %v1275 = vld [vmem:[%s10 + $0x18] sm:$0xff]
        %v1276 = vld [vmem:[%s10 + $0x20] sm:$0xff]
        %v1277 = vld [vmem:[%s10 + $0x28] sm:$0xff]
        %v1278 = vld [vmem:[%s10 + $0x30] sm:$0xff]
        %v1279 = vld [vmem:[%s10 + $0x38] sm:$0xff]
        %1281 = vset.pattern.permute.xlu0 0
        %1282 = vperm.xlu0 %1281, %v1272
        %v1283 = vpop.permute.xlu0 %1282
        %1286 = vset.pattern.permute.xlu0 0
        %1287 = vperm.xlu0 %1286, %v1273
        %v1288 = vpop.permute.xlu0 %1287
        %1291 = vset.pattern.permute.xlu0 0
        %1292 = vperm.xlu0 %1291, %v1274
        %v1293 = vpop.permute.xlu0 %1292
        %1296 = vset.pattern.permute.xlu0 0
        %1297 = vperm.xlu0 %1296, %v1275
        %v1298 = vpop.permute.xlu0 %1297
        %1301 = vset.pattern.permute.xlu0 0
        %1302 = vperm.xlu0 %1301, %v1276
        %v1303 = vpop.permute.xlu0 %1302
        %1306 = vset.pattern.permute.xlu0 0
        %1307 = vperm.xlu0 %1306, %v1277
        %v1308 = vpop.permute.xlu0 %1307
        %1311 = vset.pattern.permute.xlu0 0
        %1312 = vperm.xlu0 %1311, %v1278
        %v1313 = vpop.permute.xlu0 %1312
        %1316 = vset.pattern.permute.xlu0 0
        %1317 = vperm.xlu0 %1316, %v1279
        %v1318 = vpop.permute.xlu0 %1317
        %v1321 = vsel %vm594, %v1256, 0
        %v1324 = vsel %vm594, %v1257, 0
        %v1327 = vsel %vm594, %v1258, 0
        %v1330 = vsel %vm594, %v1259, 0
        %v1333 = vsel %vm594, %v1260, 0
        %v1336 = vsel %vm594, %v1261, 0
        %v1339 = vsel %vm594, %v1262, 0
        %v1342 = vsel %vm594, %v1263, 0
        %1344 = vmatpush.msra.mxu0 0.0
        %1345 = vmatpush.msra.mxu0 0.0
        %1346 = vmatpush.msra.mxu0 0.0
        %1347 = vmatpush.msra.mxu0 0.0
        %1348 = vmatpush.msra.mxu0 0.0
        %1349 = vmatpush.msra.mxu0 0.0
        %1350 = vmatpush.msra.mxu0 0.0
        %1351 = vmatpush.msra.mxu0 0.0
        %1352 = vmatpush.msra.mxu0 %v1271
        %1353 = vmatpush.msra.mxu0 %v1270
        %1354 = vmatpush.msra.mxu0 %v1269
        %1355 = vmatpush.msra.mxu0 %v1268
        %1356 = vmatpush.msra.mxu0 %v1267
        %1357 = vmatpush.msra.mxu0 %v1266
        %1358 = vmatpush.msra.mxu0 %v1265
        %1359 = vmatpush.msra.mxu0 %v1264
        %1360 = vmatmul.f32.gmra.mxu0 %v1321
        %v1361 = vpop.f32.mrf.mxu0
        %v1362 = vadd.f32 %v1283, %v1361
        %1363 = vmatmul.f32.gmra.mxu0 %v1324
        %v1364 = vpop.f32.mrf.mxu0
        %v1365 = vadd.f32 %v1288, %v1364
        %1366 = vmatmul.f32.gmra.mxu0 %v1327
        %v1367 = vpop.f32.mrf.mxu0
        %v1368 = vadd.f32 %v1293, %v1367
        %1369 = vmatmul.f32.gmra.mxu0 %v1330
        %v1370 = vpop.f32.mrf.mxu0
        %v1371 = vadd.f32 %v1298, %v1370
        %1372 = vmatmul.f32.gmra.mxu0 %v1333
        %v1373 = vpop.f32.mrf.mxu0
        %v1374 = vadd.f32 %v1303, %v1373
        %1375 = vmatmul.f32.gmra.mxu0 %v1336
        %v1376 = vpop.f32.mrf.mxu0
        %v1377 = vadd.f32 %v1308, %v1376
        %1378 = vmatmul.f32.gmra.mxu0 %v1339
        %v1379 = vpop.f32.mrf.mxu0
        %v1380 = vadd.f32 %v1313, %v1379
        %1381 = vmatmul.f32.gmra.mxu0 %v1342
        %v1382 = vpop.f32.mrf.mxu0
        %v1383 = vadd.f32 %v1318, %v1382
        %1384 = vdwg.mxu0
        %1385 = vadd.xlane.f32.xlu0 %v1362
        %v1386 = vpop.xlane.xlu0 %1385
        %1387 = vadd.xlane.f32.xlu0 %v1365
        %v1388 = vpop.xlane.xlu0 %1387
        %1389 = vadd.xlane.f32.xlu0 %v1368
        %v1390 = vpop.xlane.xlu0 %1389
        %1391 = vadd.xlane.f32.xlu0 %v1371
        %v1392 = vpop.xlane.xlu0 %1391
        %1393 = vadd.xlane.f32.xlu0 %v1374
        %v1394 = vpop.xlane.xlu0 %1393
        %1395 = vadd.xlane.f32.xlu0 %v1377
        %v1396 = vpop.xlane.xlu0 %1395
        %1397 = vadd.xlane.f32.xlu0 %v1380
        %v1398 = vpop.xlane.xlu0 %1397
        %1399 = vadd.xlane.f32.xlu0 %v1383
        %v1400 = vpop.xlane.xlu0 %1399
        %v1401 = vrcp.pop 128.0
        %v1402 = vmul.f32 128.0, %v1401
        %v1403 = vsub.f32 1.0, %v1402
        %v1404 = vmul.f32 %v1401, %v1403
        %v1405 = vadd.f32 %v1401, %v1404
        %vm1406 = vweird.f32 %v1401
        %v1407 = vsel %vm1406, %v1401, %v1405
        %v1408 = vmul.f32 %v1386, %v1407
        %v1409 = vmul.f32 %v1388, %v1407
        %v1410 = vmul.f32 %v1390, %v1407
        %v1411 = vmul.f32 %v1392, %v1407
        %v1412 = vmul.f32 %v1394, %v1407
        %v1413 = vmul.f32 %v1396, %v1407
        %v1414 = vmul.f32 %v1398, %v1407
        %v1415 = vmul.f32 %v1400, %v1407
        %v1416 = vsub.f32 %v1362, %v1408
        %v1417 = vsub.f32 %v1365, %v1409
        %v1418 = vsub.f32 %v1368, %v1410
        %v1419 = vsub.f32 %v1371, %v1411
        %v1420 = vsub.f32 %v1374, %v1412
        %v1421 = vsub.f32 %v1377, %v1413
        %v1422 = vsub.f32 %v1380, %v1414
        %v1423 = vsub.f32 %v1383, %v1415
        %v1424 = vmul.f32 %v1416, %v1416
        %v1425 = vmul.f32 %v1417, %v1417
        %v1426 = vmul.f32 %v1418, %v1418
        %v1427 = vmul.f32 %v1419, %v1419
        %v1428 = vmul.f32 %v1420, %v1420
        %v1429 = vmul.f32 %v1421, %v1421
        %v1430 = vmul.f32 %v1422, %v1422
        %v1431 = vmul.f32 %v1423, %v1423
        %1432 = vadd.xlane.f32.xlu0 %v1424
        %v1433 = vpop.xlane.xlu0 %1432
        %1434 = vadd.xlane.f32.xlu0 %v1425
        %v1435 = vpop.xlane.xlu0 %1434
        %1436 = vadd.xlane.f32.xlu0 %v1426
        %v1437 = vpop.xlane.xlu0 %1436
        %1438 = vadd.xlane.f32.xlu0 %v1427
        %v1439 = vpop.xlane.xlu0 %1438
        %1440 = vadd.xlane.f32.xlu0 %v1428
        %v1441 = vpop.xlane.xlu0 %1440
        %1442 = vadd.xlane.f32.xlu0 %v1429
        %v1443 = vpop.xlane.xlu0 %1442
        %1444 = vadd.xlane.f32.xlu0 %v1430
        %v1445 = vpop.xlane.xlu0 %1444
        %1446 = vadd.xlane.f32.xlu0 %v1431
        %v1447 = vpop.xlane.xlu0 %1446
        %v1448 = vmul.f32 %v1433, %v1407
        %v1449 = vmul.f32 %v1435, %v1407
        %v1450 = vmul.f32 %v1437, %v1407
        %v1451 = vmul.f32 %v1439, %v1407
        %v1452 = vmul.f32 %v1441, %v1407
        %v1453 = vmul.f32 %v1443, %v1407
        %v1454 = vmul.f32 %v1445, %v1407
        %v1455 = vmul.f32 %v1447, %v1407
        %v1456 = vadd.f32 %v1448, 1e-05
        %v1457 = vadd.f32 %v1449, 1e-05
        %v1458 = vadd.f32 %v1450, 1e-05
        %v1459 = vadd.f32 %v1451, 1e-05
        %v1460 = vadd.f32 %v1452, 1e-05
        %v1461 = vadd.f32 %v1453, 1e-05
        %v1462 = vadd.f32 %v1454, 1e-05
        %v1463 = vadd.f32 %v1455, 1e-05
        %v1464 = vrsqrt.pop %v1456
        %v1465 = vmul.f32 %v1464, %v1456
        %v1466 = vmul.f32 %v1465, %v1464
        %v1467 = vmul.f32 0.5, %v1466
        %v1468 = vsub.f32 1.5, %v1467
        %v1469 = vmul.f32 %v1464, %v1468
        %vm1470 = vweird.f32 %v1456
        %vm1471 = vweird.f32 %v1464
        %vm1472 = vmor %vm1470, %vm1471
        %v1473 = vsel %vm1472, %v1464, %v1469
        %v1474 = vrsqrt.pop %v1457
        %v1475 = vmul.f32 %v1474, %v1457
        %v1476 = vmul.f32 %v1475, %v1474
        %v1477 = vmul.f32 0.5, %v1476
        %v1478 = vsub.f32 1.5, %v1477
        %v1479 = vmul.f32 %v1474, %v1478
        %vm1480 = vweird.f32 %v1457
        %vm1481 = vweird.f32 %v1474
        %vm1482 = vmor %vm1480, %vm1481
        %v1483 = vsel %vm1482, %v1474, %v1479
        %v1484 = vrsqrt.pop %v1458
        %v1485 = vmul.f32 %v1484, %v1458
        %v1486 = vmul.f32 %v1485, %v1484
        %v1487 = vmul.f32 0.5, %v1486
        %v1488 = vsub.f32 1.5, %v1487
        %v1489 = vmul.f32 %v1484, %v1488
        %vm1490 = vweird.f32 %v1458
        %vm1491 = vweird.f32 %v1484
        %vm1492 = vmor %vm1490, %vm1491
        %v1493 = vsel %vm1492, %v1484, %v1489
        %v1494 = vrsqrt.pop %v1459
        %v1495 = vmul.f32 %v1494, %v1459
        %v1496 = vmul.f32 %v1495, %v1494
        %v1497 = vmul.f32 0.5, %v1496
        %v1498 = vsub.f32 1.5, %v1497
        %v1499 = vmul.f32 %v1494, %v1498
        %vm1500 = vweird.f32 %v1459
        %vm1501 = vweird.f32 %v1494
        %vm1502 = vmor %vm1500, %vm1501
        %v1503 = vsel %vm1502, %v1494, %v1499
        %v1504 = vrsqrt.pop %v1460
        %v1505 = vmul.f32 %v1504, %v1460
        %v1506 = vmul.f32 %v1505, %v1504
        %v1507 = vmul.f32 0.5, %v1506
        %v1508 = vsub.f32 1.5, %v1507
        %v1509 = vmul.f32 %v1504, %v1508
        %vm1510 = vweird.f32 %v1460
        %vm1511 = vweird.f32 %v1504
        %vm1512 = vmor %vm1510, %vm1511
        %v1513 = vsel %vm1512, %v1504, %v1509
        %v1514 = vrsqrt.pop %v1461
        %v1515 = vmul.f32 %v1514, %v1461
        %v1516 = vmul.f32 %v1515, %v1514
        %v1517 = vmul.f32 0.5, %v1516
        %v1518 = vsub.f32 1.5, %v1517
        %v1519 = vmul.f32 %v1514, %v1518
        %vm1520 = vweird.f32 %v1461
        %vm1521 = vweird.f32 %v1514
        %vm1522 = vmor %vm1520, %vm1521
        %v1523 = vsel %vm1522, %v1514, %v1519
        %v1524 = vrsqrt.pop %v1462
        %v1525 = vmul.f32 %v1524, %v1462
        %v1526 = vmul.f32 %v1525, %v1524
        %v1527 = vmul.f32 0.5, %v1526
        %v1528 = vsub.f32 1.5, %v1527
        %v1529 = vmul.f32 %v1524, %v1528
        %vm1530 = vweird.f32 %v1462
        %vm1531 = vweird.f32 %v1524
        %vm1532 = vmor %vm1530, %vm1531
        %v1533 = vsel %vm1532, %v1524, %v1529
        %v1534 = vrsqrt.pop %v1463
        %v1535 = vmul.f32 %v1534, %v1463
        %v1536 = vmul.f32 %v1535, %v1534
        %v1537 = vmul.f32 0.5, %v1536
        %v1538 = vsub.f32 1.5, %v1537
        %v1539 = vmul.f32 %v1534, %v1538
        %vm1540 = vweird.f32 %v1463
        %vm1541 = vweird.f32 %v1534
        %vm1542 = vmor %vm1540, %vm1541
        %v1543 = vsel %vm1542, %v1534, %v1539
        %v1544 = vmul.f32 %v1416, %v1473
        %v1545 = vmul.f32 %v1417, %v1483
        %v1546 = vmul.f32 %v1418, %v1493
        %v1547 = vmul.f32 %v1419, %v1503
        %v1548 = vmul.f32 %v1420, %v1513
        %v1549 = vmul.f32 %v1421, %v1523
        %v1550 = vmul.f32 %v1422, %v1533
        %v1551 = vmul.f32 %v1423, %v1543
        %1552 = vst [vmem:[%s502] sm:$0xff] %v1544
        %1553 = vst [vmem:[%s502 + $0x8] sm:$0xff] %v1545
        %1554 = vst [vmem:[%s502 + $0x10] sm:$0xff] %v1546
        %1555 = vst [vmem:[%s502 + $0x18] sm:$0xff] %v1547
        %1556 = vst [vmem:[%s502 + $0x20] sm:$0xff] %v1548
        %1557 = vst [vmem:[%s502 + $0x28] sm:$0xff] %v1549
        %1558 = vst [vmem:[%s502 + $0x30] sm:$0xff] %v1550
        %1559 = vst [vmem:[%s502 + $0x38] sm:$0xff] %v1551
        %s1560 = sand.u32 %s284, 1
        %s1561 = scalar_lea.sflag [#allocation8], %s1560
        %s1562 = sand.u32 %s284, 1
        %s1563 = smul.addr %s1562, 64
        %s1564 = scalar_lea.vmem [#allocation15], %s1563
        // Predicated region
        $region92: #{tpu_custom_call.1} parent=63 // pred_check
          %p1565 = pneg %p294
        $region93: #{tpu_custom_call.1} parent=63 // pred_check_branch
          %1567 = sbr.rel (%p1565) target = $region95
        $region94: #{tpu_custom_call.1} parent=63 // pred_region
          %1569 = vsyncadd %s1561, 0
          %s1570 = smul.addr %s30, 8
          %s1571 = smul.addr %s1570, 8
          %s1572 = scalar_lea.hbm %s11, %s1571
          %s1573 = sshll.u32 %s1564, 4
          %s1574 = int_to_ptr.vmem [resolvable:$true] %s1573
          %s1575 = sshll.u32 %s1572, 4
          %s1576 = int_to_ptr.hbm [resolvable:$true] %s1575
          %1581 = dma.vmem_to_hbm [thread:$0]  %s1574, 1024, %s1576, %s1561, 128, 128, 8
        $region95: #{tpu_custom_call.1} parent=63 // pred_fallthru
          _
      $region64: #{tpu_custom_call.1} parent=5 // pred_fallthru
        _
      %p1582 = scmp.le.s32.totalorder 2, %s25
      // Predicated region
      $region96: #{tpu_custom_call.1} parent=5 // pred_check
        %p1583 = pneg %p1582
      $region97: #{tpu_custom_call.1} parent=5 // pred_check_branch
        %1585 = sbr.rel (%p1583) target = $region99
      $region98: #{tpu_custom_call.1} parent=5 // pred_region
        %s1586 = ssub.s32 %s25, 2
        // Predicated region
        $region100: #{tpu_custom_call.1} parent=98 // pred_check
          %p1587 = pneg %p300
        $region101: #{tpu_custom_call.1} parent=98 // pred_check_branch
          %1589 = sbr.rel (%p1587) target = $region103
        $region102: #{tpu_custom_call.1} parent=98 // pred_region
          %s1590 = sand.u32 %s285, 1
          %s1591 = scalar_lea.sflag [#allocation8], %s1590
          %s1592 = sand.u32 %s285, 1
          %s1593 = smul.addr %s1592, 64
          %s1594 = scalar_lea.vmem [#allocation15], %s1593
          %1596 = dma.done %s1591, 1024
        $region103: #{tpu_custom_call.1} parent=98 // pred_fallthru
          _
      $region99: #{tpu_custom_call.1} parent=5 // pred_fallthru
        _
    $region6: #{tpu_custom_call.1} parent=1 // loop_footer
      %s29 = sadd.s32 1, %s25
    $region7: #{tpu_custom_call.1} parent=1 // loop_footer_branch
      %24 = sbr.rel target = $region3
    $region8: #{tpu_custom_call.1} parent=1 // loop_exit
      _
    %1597 = vsyncpa [#allocation7], 1
    %s1598 = scalar_lea.sflag [#allocation7], 1
    %1599 = vsyncpa %s1598, 1
    %1600 = vsyncpa [#allocation10], 1
    %1601 = vsyncpa [#allocation13], 1
    %1602 = vsyncpa [#allocation8], 1
    %s1603 = scalar_lea.sflag [#allocation8], 1
    %1604 = vsyncpa %s1603, 1

</llo_original>
